<compile_context>
chip_gen: v5e
topology: v5e:2x2
jax: 0.10.0
libtpu: 0.0.40
codegen_flags: <defaults>
</compile_context>

<pallas_src>
import functools

import jax
import jax.numpy as jnp
from jax.experimental import pallas as pl
from jax.experimental.pallas import tpu as pltpu

_GB = 128          # per-gate lane block (one vreg lane width)
_GW = 4 * _GB      # packed gate width: blocks ordered (i, f, o, g)


def _round_up(n, m):
    return (n + m - 1) // m * m


def _rnn_kernel(x_ref, w_ref, out_ref, xg_ref, *,
                seq_len, B, H, O, I_pad,
                off_wih, off_whh, off_b, off_wout, off_bout, off_h0, off_c0):
    """x_ref: (seq*B, I_pad); w_ref: (rows, 512) packed params; out_ref: (8,128);
    xg_ref: (seq*B, 512) VMEM scratch for the hoisted input projection."""
    f32 = jnp.float32

    # --- Hoisted input projection + fused bias (off the serial chain) --------
    # (seq*B, I_pad) @ (I_pad, 4*128) + (1, 4*128)
    xg_ref[...] = (jnp.dot(x_ref[...], w_ref[off_wih:off_wih + I_pad, :],
                           preferred_element_type=f32)
                   + w_ref[off_b:off_b + 1, :])

    # h, c kept 128 lanes wide; lanes H:128 are exactly zero throughout
    # (zero-padded weight columns -> gate preact 0 -> i=f=o=0.5, g=0 there).
    h = w_ref[off_h0:off_h0 + B, 0:_GB]                 # (B, 128)
    c = w_ref[off_c0:off_c0 + B, 0:_GB]                 # (B, 128)
    whh = w_ref[off_whh:off_whh + _GB, :]               # (128, 512), rows H:128 zero

    # --- Fully-unrolled recurrence: one MXU matmul + one tanh per step -------
    for t in range(seq_len):
        gates = (jnp.dot(h, whh, preferred_element_type=f32)
                 + xg_ref[t * B:(t + 1) * B, :])        # (B, 512) blocks i|f|o|g
        tg = jnp.tanh(gates)                            # single EUP launch
        # sigmoid(x) == 0.5*tanh(x/2)+0.5 ; the /2 is folded into W/b for i,f,o
        s = tg[:, 0:3 * _GB] * 0.5 + 0.5
        i = s[:, 0 * _GB:1 * _GB]                       # 128-aligned -> free slices
        f = s[:, 1 * _GB:2 * _GB]
        o = s[:, 2 * _GB:3 * _GB]
        g = tg[:, 3 * _GB:4 * _GB]
        c = f * c + i * g
        h = o * jnp.tanh(c)

    # --- hidden2Cat + log_softmax over the O real lanes ----------------------
    logits = (jnp.dot(h[:, 0:H], w_ref[off_wout:off_wout + H, 0:_GB],
                      preferred_element_type=f32)
              + w_ref[off_bout:off_bout + 1, 0:_GB])    # (B, 128), lanes >= O are 0
    lane = jax.lax.broadcasted_iota(jnp.int32, (B, _GB), 1)
    masked = jnp.where(lane < O, logits, -1e30)
    m = jnp.max(masked, axis=1, keepdims=True)
    lse = jnp.log(jnp.sum(jnp.exp(masked - m), axis=1, keepdims=True))
    out_row = logits - (m + lse)

    # --- Packed output: row 0..B-1 = log-probs, B..2B-1 = h_n, 2B..3B-1 = c_n
    out_ref[...] = jnp.zeros_like(out_ref)
    out_ref[0:B, :] = out_row
    out_ref[B:2 * B, :] = h
    out_ref[2 * B:3 * B, :] = c


def _pack_params(w_ih, w_hh, b_ih, b_hh, w_out, b_out, h0, c0, *, I_pad, H, O, B):
    """Pack all parameters into one (rows, 512) f32 buffer.

    Gate blocks are reordered from PyTorch (i,f,g,o) to (i,f,o,g), each gate is
    zero-padded to its own 128-lane block, and the sigmoid gates (i,f,o) are
    pre-scaled by 0.5 (so sigmoid == 0.5*tanh+0.5 needs a single tanh in-kernel).
    All row offsets are multiples of 8 (sublane-tile aligned)."""
    f32 = jnp.float32

    def gate_blocks(a):                       # a: (rows, 4H), torch order i,f,g,o
        rows = a.shape[0]
        gi, gf, gg, go = (a[:, 0:H], a[:, H:2 * H], a[:, 2 * H:3 * H], a[:, 3 * H:4 * H])

        def blk(g, scale):
            return jnp.zeros((rows, _GB), f32).at[:, :H].set(g.astype(f32) * scale)

        return jnp.concatenate([blk(gi, 0.5), blk(gf, 0.5), blk(go, 0.5), blk(gg, 1.0)],
                               axis=1)                                      # (rows, 512)

    def pad_rows(a, rows):
        return jnp.zeros((rows, a.shape[1]), f32).at[:a.shape[0], :].set(a)

    def pad_lanes(a, lanes):
        return jnp.zeros((a.shape[0], lanes), f32).at[:, :a.shape[1]].set(a.astype(f32))

    blocks = [
        ("wih", pad_rows(gate_blocks(jnp.transpose(w_ih)), I_pad)),        # (I_pad, 512)
        ("whh", pad_rows(gate_blocks(jnp.transpose(w_hh)), _GB)),          # (128,  512)
        ("b", pad_rows(gate_blocks((b_ih + b_hh)[None, :]), 8)),           # (8,    512)
        ("wout", pad_rows(pad_lanes(jnp.transpose(w_out), _GW), _round_up(H, 8))),
        ("bout", pad_rows(pad_lanes(b_out[None, :], _GW), 8)),
        ("h0", pad_rows(pad_lanes(h0.reshape(B, H), _GW), 8)),
        ("c0", pad_rows(pad_lanes(c0.reshape(B, H), _GW), 8)),
    ]
    offs, r = {}, 0
    for name, blk_ in blocks:
        offs[name] = r
        r += blk_.shape[0]
    pack = jnp.concatenate([blk_ for _, blk_ in blocks], axis=0)            # (rows, 512)
    return pack, offs


def rnn_forward(x, w_ih, w_hh, b_ih, b_hh, w_out, b_out, h0, c0):
    """x: (seq, batch, input_size). Weights in PyTorch layout:
       w_ih (4H, I), w_hh (4H, H), b_* (4H,), w_out (O, H), b_out (O,)."""
    seq_len, B, I = x.shape
    H = w_hh.shape[1]
    O = w_out.shape[0]
    assert w_ih.shape == (4 * H, I) and w_hh.shape == (4 * H, H)
    assert H <= _GB and O <= _GB and 3 * B <= 8, "packing assumes small H/O/B"
    I_pad = _round_up(I, 8)
    f32 = jnp.float32

    pack, off = _pack_params(w_ih, w_hh, b_ih, b_hh, w_out, b_out, h0, c0,
                             I_pad=I_pad, H=H, O=O, B=B)
    x2d = jnp.zeros((seq_len * B, I_pad), f32).at[:, :I].set(
        x.reshape(seq_len * B, I).astype(f32))

    kernel = functools.partial(
        _rnn_kernel, seq_len=seq_len, B=B, H=H, O=O, I_pad=I_pad,
        off_wih=off["wih"], off_whh=off["whh"], off_b=off["b"],
        off_wout=off["wout"], off_bout=off["bout"],
        off_h0=off["h0"], off_c0=off["c0"])

    vmem = pl.BlockSpec(memory_space=pltpu.MemorySpace.VMEM)
    packed_out = pl.pallas_call(
        kernel,
        out_shape=jax.ShapeDtypeStruct((8, _GB), f32),
        in_specs=[vmem, vmem],
        out_specs=vmem,
        scratch_shapes=[pltpu.VMEM((seq_len * B, _GW), f32)],
    )(x2d, pack)

    out = packed_out[0:B, 0:O]
    hn = packed_out[B:2 * B, 0:H]
    cn = packed_out[2 * B:3 * B, 0:H]
    return out, (hn, cn)


def rnn_reference(x, w_ih, w_hh, b_ih, b_hh, w_out, b_out, h0, c0):
    """Pure-JAX reference mirroring torch.nn.LSTM + Linear + log_softmax,
    with matmul precision pinned so the comparison is f32-faithful."""
    HIGH = jax.lax.Precision.HIGHEST
    H = w_hh.shape[1]
    h = h0.reshape(x.shape[1], H)
    c = c0.reshape(x.shape[1], H)
    for t in range(x.shape[0]):
        gates = (jnp.dot(x[t], w_ih.T, precision=HIGH)
                 + jnp.dot(h, w_hh.T, precision=HIGH) + b_ih + b_hh)
        i = jax.nn.sigmoid(gates[:, 0:H])
        f = jax.nn.sigmoid(gates[:, H:2 * H])
        g = jnp.tanh(gates[:, 2 * H:3 * H])
        o = jax.nn.sigmoid(gates[:, 3 * H:4 * H])
        c = f * c + i * g
        h = o * jnp.tanh(c)
    logits = jnp.dot(h, w_out.T, precision=HIGH) + b_out
    return jax.nn.log_softmax(logits, axis=1), h, c


if __name__ == "__main__":
    # Shapes consistent with the module: seq=8, batch=1 (forced by init_hidden's
    # (1,1,H) state), input_size=16, hidden_size=32, output=8.
    seq_len, batch = 8, 1
    input_size, hidden_size, output_size = 16, 32, 8

    key = jax.random.PRNGKey(0)
    ks = jax.random.split(key, 8)
    bound = 1.0 / jnp.sqrt(hidden_size)  # PyTorch default LSTM/Linear init scale
    u = lambda k, shape: jax.random.uniform(k, shape, jnp.float32, -bound, bound)

    x = jax.random.normal(ks[0], (seq_len, batch, input_size), jnp.float32)
    w_ih = u(ks[1], (4 * hidden_size, input_size))
    w_hh = u(ks[2], (4 * hidden_size, hidden_size))
    b_ih = u(ks[3], (4 * hidden_size,))
    b_hh = u(ks[4], (4 * hidden_size,))
    w_out = u(ks[5], (output_size, hidden_size))
    b_out = u(ks[6], (output_size,))
    h0 = jnp.zeros((1, 1, hidden_size), jnp.float32)  # self.init_hidden()
    c0 = jnp.zeros((1, 1, hidden_size), jnp.float32)

    out, (hn, cn) = rnn_forward(x, w_ih, w_hh, b_ih, b_hh, w_out, b_out, h0, c0)
    out = jax.block_until_ready(out)

    ref_out, ref_h, ref_c = rnn_reference(x, w_ih, w_hh, b_ih, b_hh,
                                          w_out, b_out, h0, c0)
    assert out.shape == (batch, output_size)
    assert jnp.allclose(out, ref_out, atol=1e-5, rtol=1e-5), (out, ref_out)
    assert jnp.allclose(hn, ref_h, atol=1e-5, rtol=1e-5)
    assert jnp.allclose(cn, ref_c, atol=1e-5, rtol=1e-5)

    print("KERNEL_OK")
</pallas_src>

<mosaic_0001>
module attributes {stable_mosaic.version = 11 : i64} {
  func.func @_rnn_kernel(%arg0: memref<8x16xf32, #tpu.memory_space<vmem>>, %arg1: memref<208x512xf32, #tpu.memory_space<vmem>>, %arg2: memref<8x128xf32, #tpu.memory_space<vmem>>, %arg3: memref<8x512xf32, #tpu.memory_space<vmem>>) attributes {dimension_semantics = [], scalar_prefetch = 0 : i64, scratch_operands = 1 : i64, tpu.core_type = #tpu.core_type<tc>} {
    %c0 = arith.constant 0 : index
    %c0_0 = arith.constant 0 : index
    %0 = vector.load %arg0[%c0, %c0_0] : memref<8x16xf32, #tpu.memory_space<vmem>>, vector<8x16xf32>
    %c0_1 = arith.constant 0 : index
    %c0_2 = arith.constant 0 : index
    %1 = vector.load %arg1[%c0_1, %c0_2] : memref<208x512xf32, #tpu.memory_space<vmem>>, vector<16x512xf32>
    %cst = arith.constant dense<0.000000e+00> : vector<8x512xf32>
    %2 = tpu.matmul %0, %1, %cst {dimension_numbers = #tpu.dot_dimension_numbers<[1], [0], [0], [1], [0, 0, 1, 1], [], []>} : vector<8x16xf32>, vector<16x512xf32>, vector<8x512xf32> -> vector<8x512xf32>
    %c144 = arith.constant 144 : index
    %c0_3 = arith.constant 0 : index
    %3 = vector.load %arg1[%c144, %c0_3] : memref<208x512xf32, #tpu.memory_space<vmem>>, vector<1x512xf32>
    %4 = vector.broadcast %3 : vector<1x512xf32> to vector<8x512xf32>
    %5 = arith.addf %2, %4 : vector<8x512xf32>
    %c0_4 = arith.constant 0 : index
    %c0_5 = arith.constant 0 : index
    %6 = vector.load %arg3[%c0_4, %c0_5] : memref<8x512xf32, #tpu.memory_space<vmem>>, vector<8x512xf32>
    tpu.vector_store %arg3[%c0_4, %c0_5], %5 {strides = array<i32>} : memref<8x512xf32, #tpu.memory_space<vmem>>, vector<8x512xf32>,
    %c192 = arith.constant 192 : index
    %c0_6 = arith.constant 0 : index
    %7 = vector.load %arg1[%c192, %c0_6] : memref<208x512xf32, #tpu.memory_space<vmem>>, vector<1x128xf32>
    %c200 = arith.constant 200 : index
    %c0_7 = arith.constant 0 : index
    %8 = vector.load %arg1[%c200, %c0_7] : memref<208x512xf32, #tpu.memory_space<vmem>>, vector<1x128xf32>
    %c16 = arith.constant 16 : index
    %c0_8 = arith.constant 0 : index
    %9 = vector.load %arg1[%c16, %c0_8] : memref<208x512xf32, #tpu.memory_space<vmem>>, vector<128x512xf32>
    %cst_9 = arith.constant dense<0.000000e+00> : vector<1x512xf32>
    %10 = tpu.matmul %7, %9, %cst_9 {dimension_numbers = #tpu.dot_dimension_numbers<[1], [0], [0], [1], [0, 0, 1, 1], [], []>} : vector<1x128xf32>, vector<128x512xf32>, vector<1x512xf32> -> vector<1x512xf32>
    %c0_10 = arith.constant 0 : index
    %c0_11 = arith.constant 0 : index
    %11 = vector.load %arg3[%c0_10, %c0_11] : memref<8x512xf32, #tpu.memory_space<vmem>>, vector<1x512xf32>
    %12 = arith.addf %10, %11 : vector<1x512xf32>
    %13 = math.tanh %12 : vector<1x512xf32>
    %14 = vector.extract_strided_slice %13 {offsets = [0, 0], sizes = [1, 384], strides = [1, 1]} : vector<1x512xf32> to vector<1x384xf32>
    %cst_12 = arith.constant 5.000000e-01 : f32
    %15 = vector.broadcast %cst_12 : f32 to vector<1x384xf32>
    %16 = arith.mulf %14, %15 : vector<1x384xf32>
    %cst_13 = arith.constant 5.000000e-01 : f32
    %17 = vector.broadcast %cst_13 : f32 to vector<1x384xf32>
    %18 = arith.addf %16, %17 : vector<1x384xf32>
    %19 = vector.extract_strided_slice %18 {offsets = [0, 0], sizes = [1, 128], strides = [1, 1]} : vector<1x384xf32> to vector<1x128xf32>
    %20 = vector.extract_strided_slice %18 {offsets = [0, 128], sizes = [1, 128], strides = [1, 1]} : vector<1x384xf32> to vector<1x128xf32>
    %21 = vector.extract_strided_slice %18 {offsets = [0, 256], sizes = [1, 128], strides = [1, 1]} : vector<1x384xf32> to vector<1x128xf32>
    %22 = vector.extract_strided_slice %13 {offsets = [0, 384], sizes = [1, 128], strides = [1, 1]} : vector<1x512xf32> to vector<1x128xf32>
    %23 = arith.mulf %20, %8 : vector<1x128xf32>
    %24 = arith.mulf %19, %22 : vector<1x128xf32>
    %25 = arith.addf %23, %24 : vector<1x128xf32>
    %26 = math.tanh %25 : vector<1x128xf32>
    %27 = arith.mulf %21, %26 : vector<1x128xf32>
    %cst_14 = arith.constant dense<0.000000e+00> : vector<1x512xf32>
    %28 = tpu.matmul %27, %9, %cst_14 {dimension_numbers = #tpu.dot_dimension_numbers<[1], [0], [0], [1], [0, 0, 1, 1], [], []>} : vector<1x128xf32>, vector<128x512xf32>, vector<1x512xf32> -> vector<1x512xf32>
    %c1 = arith.constant 1 : index
    %c0_15 = arith.constant 0 : index
    %29 = vector.load %arg3[%c1, %c0_15] : memref<8x512xf32, #tpu.memory_space<vmem>>, vector<1x512xf32>
    %30 = arith.addf %28, %29 : vector<1x512xf32>
    %31 = math.tanh %30 : vector<1x512xf32>
    %32 = vector.extract_strided_slice %31 {offsets = [0, 0], sizes = [1, 384], strides = [1, 1]} : vector<1x512xf32> to vector<1x384xf32>
    %cst_16 = arith.constant 5.000000e-01 : f32
    %33 = vector.broadcast %cst_16 : f32 to vector<1x384xf32>
    %34 = arith.mulf %32, %33 : vector<1x384xf32>
    %cst_17 = arith.constant 5.000000e-01 : f32
    %35 = vector.broadcast %cst_17 : f32 to vector<1x384xf32>
    %36 = arith.addf %34, %35 : vector<1x384xf32>
    %37 = vector.extract_strided_slice %36 {offsets = [0, 0], sizes = [1, 128], strides = [1, 1]} : vector<1x384xf32> to vector<1x128xf32>
    %38 = vector.extract_strided_slice %36 {offsets = [0, 128], sizes = [1, 128], strides = [1, 1]} : vector<1x384xf32> to vector<1x128xf32>
    %39 = vector.extract_strided_slice %36 {offsets = [0, 256], sizes = [1, 128], strides = [1, 1]} : vector<1x384xf32> to vector<1x128xf32>
    %40 = vector.extract_strided_slice %31 {offsets = [0, 384], sizes = [1, 128], strides = [1, 1]} : vector<1x512xf32> to vector<1x128xf32>
    %41 = arith.mulf %38, %25 : vector<1x128xf32>
    %42 = arith.mulf %37, %40 : vector<1x128xf32>
    %43 = arith.addf %41, %42 : vector<1x128xf32>
    %44 = math.tanh %43 : vector<1x128xf32>
    %45 = arith.mulf %39, %44 : vector<1x128xf32>
    %cst_18 = arith.constant dense<0.000000e+00> : vector<1x512xf32>
    %46 = tpu.matmul %45, %9, %cst_18 {dimension_numbers = #tpu.dot_dimension_numbers<[1], [0], [0], [1], [0, 0, 1, 1], [], []>} : vector<1x128xf32>, vector<128x512xf32>, vector<1x512xf32> -> vector<1x512xf32>
    %c2 = arith.constant 2 : index
    %c0_19 = arith.constant 0 : index
    %47 = vector.load %arg3[%c2, %c0_19] : memref<8x512xf32, #tpu.memory_space<vmem>>, vector<1x512xf32>
    %48 = arith.addf %46, %47 : vector<1x512xf32>
    %49 = math.tanh %48 : vector<1x512xf32>
    %50 = vector.extract_strided_slice %49 {offsets = [0, 0], sizes = [1, 384], strides = [1, 1]} : vector<1x512xf32> to vector<1x384xf32>
    %cst_20 = arith.constant 5.000000e-01 : f32
    %51 = vector.broadcast %cst_20 : f32 to vector<1x384xf32>
    %52 = arith.mulf %50, %51 : vector<1x384xf32>
    %cst_21 = arith.constant 5.000000e-01 : f32
    %53 = vector.broadcast %cst_21 : f32 to vector<1x384xf32>
    %54 = arith.addf %52, %53 : vector<1x384xf32>
    %55 = vector.extract_strided_slice %54 {offsets = [0, 0], sizes = [1, 128], strides = [1, 1]} : vector<1x384xf32> to vector<1x128xf32>
    %56 = vector.extract_strided_slice %54 {offsets = [0, 128], sizes = [1, 128], strides = [1, 1]} : vector<1x384xf32> to vector<1x128xf32>
    %57 = vector.extract_strided_slice %54 {offsets = [0, 256], sizes = [1, 128], strides = [1, 1]} : vector<1x384xf32> to vector<1x128xf32>
    %58 = vector.extract_strided_slice %49 {offsets = [0, 384], sizes = [1, 128], strides = [1, 1]} : vector<1x512xf32> to vector<1x128xf32>
    %59 = arith.mulf %56, %43 : vector<1x128xf32>
    %60 = arith.mulf %55, %58 : vector<1x128xf32>
    %61 = arith.addf %59, %60 : vector<1x128xf32>
    %62 = math.tanh %61 : vector<1x128xf32>
    %63 = arith.mulf %57, %62 : vector<1x128xf32>
    %cst_22 = arith.constant dense<0.000000e+00> : vector<1x512xf32>
    %64 = tpu.matmul %63, %9, %cst_22 {dimension_numbers = #tpu.dot_dimension_numbers<[1], [0], [0], [1], [0, 0, 1, 1], [], []>} : vector<1x128xf32>, vector<128x512xf32>, vector<1x512xf32> -> vector<1x512xf32>
    %c3 = arith.constant 3 : index
    %c0_23 = arith.constant 0 : index
    %65 = vector.load %arg3[%c3, %c0_23] : memref<8x512xf32, #tpu.memory_space<vmem>>, vector<1x512xf32>
    %66 = arith.addf %64, %65 : vector<1x512xf32>
    %67 = math.tanh %66 : vector<1x512xf32>
    %68 = vector.extract_strided_slice %67 {offsets = [0, 0], sizes = [1, 384], strides = [1, 1]} : vector<1x512xf32> to vector<1x384xf32>
    %cst_24 = arith.constant 5.000000e-01 : f32
    %69 = vector.broadcast %cst_24 : f32 to vector<1x384xf32>
    %70 = arith.mulf %68, %69 : vector<1x384xf32>
    %cst_25 = arith.constant 5.000000e-01 : f32
    %71 = vector.broadcast %cst_25 : f32 to vector<1x384xf32>
    %72 = arith.addf %70, %71 : vector<1x384xf32>
    %73 = vector.extract_strided_slice %72 {offsets = [0, 0], sizes = [1, 128], strides = [1, 1]} : vector<1x384xf32> to vector<1x128xf32>
    %74 = vector.extract_strided_slice %72 {offsets = [0, 128], sizes = [1, 128], strides = [1, 1]} : vector<1x384xf32> to vector<1x128xf32>
    %75 = vector.extract_strided_slice %72 {offsets = [0, 256], sizes = [1, 128], strides = [1, 1]} : vector<1x384xf32> to vector<1x128xf32>
    %76 = vector.extract_strided_slice %67 {offsets = [0, 384], sizes = [1, 128], strides = [1, 1]} : vector<1x512xf32> to vector<1x128xf32>
    %77 = arith.mulf %74, %61 : vector<1x128xf32>
    %78 = arith.mulf %73, %76 : vector<1x128xf32>
    %79 = arith.addf %77, %78 : vector<1x128xf32>
    %80 = math.tanh %79 : vector<1x128xf32>
    %81 = arith.mulf %75, %80 : vector<1x128xf32>
    %cst_26 = arith.constant dense<0.000000e+00> : vector<1x512xf32>
    %82 = tpu.matmul %81, %9, %cst_26 {dimension_numbers = #tpu.dot_dimension_numbers<[1], [0], [0], [1], [0, 0, 1, 1], [], []>} : vector<1x128xf32>, vector<128x512xf32>, vector<1x512xf32> -> vector<1x512xf32>
    %c4 = arith.constant 4 : index
    %c0_27 = arith.constant 0 : index
    %83 = vector.load %arg3[%c4, %c0_27] : memref<8x512xf32, #tpu.memory_space<vmem>>, vector<1x512xf32>
    %84 = arith.addf %82, %83 : vector<1x512xf32>
    %85 = math.tanh %84 : vector<1x512xf32>
    %86 = vector.extract_strided_slice %85 {offsets = [0, 0], sizes = [1, 384], strides = [1, 1]} : vector<1x512xf32> to vector<1x384xf32>
    %cst_28 = arith.constant 5.000000e-01 : f32
    %87 = vector.broadcast %cst_28 : f32 to vector<1x384xf32>
    %88 = arith.mulf %86, %87 : vector<1x384xf32>
    %cst_29 = arith.constant 5.000000e-01 : f32
    %89 = vector.broadcast %cst_29 : f32 to vector<1x384xf32>
    %90 = arith.addf %88, %89 : vector<1x384xf32>
    %91 = vector.extract_strided_slice %90 {offsets = [0, 0], sizes = [1, 128], strides = [1, 1]} : vector<1x384xf32> to vector<1x128xf32>
    %92 = vector.extract_strided_slice %90 {offsets = [0, 128], sizes = [1, 128], strides = [1, 1]} : vector<1x384xf32> to vector<1x128xf32>
    %93 = vector.extract_strided_slice %90 {offsets = [0, 256], sizes = [1, 128], strides = [1, 1]} : vector<1x384xf32> to vector<1x128xf32>
    %94 = vector.extract_strided_slice %85 {offsets = [0, 384], sizes = [1, 128], strides = [1, 1]} : vector<1x512xf32> to vector<1x128xf32>
    %95 = arith.mulf %92, %79 : vector<1x128xf32>
    %96 = arith.mulf %91, %94 : vector<1x128xf32>
    %97 = arith.addf %95, %96 : vector<1x128xf32>
    %98 = math.tanh %97 : vector<1x128xf32>
    %99 = arith.mulf %93, %98 : vector<1x128xf32>
    %cst_30 = arith.constant dense<0.000000e+00> : vector<1x512xf32>
    %100 = tpu.matmul %99, %9, %cst_30 {dimension_numbers = #tpu.dot_dimension_numbers<[1], [0], [0], [1], [0, 0, 1, 1], [], []>} : vector<1x128xf32>, vector<128x512xf32>, vector<1x512xf32> -> vector<1x512xf32>
    %c5 = arith.constant 5 : index
    %c0_31 = arith.constant 0 : index
    %101 = vector.load %arg3[%c5, %c0_31] : memref<8x512xf32, #tpu.memory_space<vmem>>, vector<1x512xf32>
    %102 = arith.addf %100, %101 : vector<1x512xf32>
    %103 = math.tanh %102 : vector<1x512xf32>
    %104 = vector.extract_strided_slice %103 {offsets = [0, 0], sizes = [1, 384], strides = [1, 1]} : vector<1x512xf32> to vector<1x384xf32>
    %cst_32 = arith.constant 5.000000e-01 : f32
    %105 = vector.broadcast %cst_32 : f32 to vector<1x384xf32>
    %106 = arith.mulf %104, %105 : vector<1x384xf32>
    %cst_33 = arith.constant 5.000000e-01 : f32
    %107 = vector.broadcast %cst_33 : f32 to vector<1x384xf32>
    %108 = arith.addf %106, %107 : vector<1x384xf32>
    %109 = vector.extract_strided_slice %108 {offsets = [0, 0], sizes = [1, 128], strides = [1, 1]} : vector<1x384xf32> to vector<1x128xf32>
    %110 = vector.extract_strided_slice %108 {offsets = [0, 128], sizes = [1, 128], strides = [1, 1]} : vector<1x384xf32> to vector<1x128xf32>
    %111 = vector.extract_strided_slice %108 {offsets = [0, 256], sizes = [1, 128], strides = [1, 1]} : vector<1x384xf32> to vector<1x128xf32>
    %112 = vector.extract_strided_slice %103 {offsets = [0, 384], sizes = [1, 128], strides = [1, 1]} : vector<1x512xf32> to vector<1x128xf32>
    %113 = arith.mulf %110, %97 : vector<1x128xf32>
    %114 = arith.mulf %109, %112 : vector<1x128xf32>
    %115 = arith.addf %113, %114 : vector<1x128xf32>
    %116 = math.tanh %115 : vector<1x128xf32>
    %117 = arith.mulf %111, %116 : vector<1x128xf32>
    %cst_34 = arith.constant dense<0.000000e+00> : vector<1x512xf32>
    %118 = tpu.matmul %117, %9, %cst_34 {dimension_numbers = #tpu.dot_dimension_numbers<[1], [0], [0], [1], [0, 0, 1, 1], [], []>} : vector<1x128xf32>, vector<128x512xf32>, vector<1x512xf32> -> vector<1x512xf32>
    %c6 = arith.constant 6 : index
    %c0_35 = arith.constant 0 : index
    %119 = vector.load %arg3[%c6, %c0_35] : memref<8x512xf32, #tpu.memory_space<vmem>>, vector<1x512xf32>
    %120 = arith.addf %118, %119 : vector<1x512xf32>
    %121 = math.tanh %120 : vector<1x512xf32>
    %122 = vector.extract_strided_slice %121 {offsets = [0, 0], sizes = [1, 384], strides = [1, 1]} : vector<1x512xf32> to vector<1x384xf32>
    %cst_36 = arith.constant 5.000000e-01 : f32
    %123 = vector.broadcast %cst_36 : f32 to vector<1x384xf32>
    %124 = arith.mulf %122, %123 : vector<1x384xf32>
    %cst_37 = arith.constant 5.000000e-01 : f32
    %125 = vector.broadcast %cst_37 : f32 to vector<1x384xf32>
    %126 = arith.addf %124, %125 : vector<1x384xf32>
    %127 = vector.extract_strided_slice %126 {offsets = [0, 0], sizes = [1, 128], strides = [1, 1]} : vector<1x384xf32> to vector<1x128xf32>
    %128 = vector.extract_strided_slice %126 {offsets = [0, 128], sizes = [1, 128], strides = [1, 1]} : vector<1x384xf32> to vector<1x128xf32>
    %129 = vector.extract_strided_slice %126 {offsets = [0, 256], sizes = [1, 128], strides = [1, 1]} : vector<1x384xf32> to vector<1x128xf32>
    %130 = vector.extract_strided_slice %121 {offsets = [0, 384], sizes = [1, 128], strides = [1, 1]} : vector<1x512xf32> to vector<1x128xf32>
    %131 = arith.mulf %128, %115 : vector<1x128xf32>
    %132 = arith.mulf %127, %130 : vector<1x128xf32>
    %133 = arith.addf %131, %132 : vector<1x128xf32>
    %134 = math.tanh %133 : vector<1x128xf32>
    %135 = arith.mulf %129, %134 : vector<1x128xf32>
    %cst_38 = arith.constant dense<0.000000e+00> : vector<1x512xf32>
    %136 = tpu.matmul %135, %9, %cst_38 {dimension_numbers = #tpu.dot_dimension_numbers<[1], [0], [0], [1], [0, 0, 1, 1], [], []>} : vector<1x128xf32>, vector<128x512xf32>, vector<1x512xf32> -> vector<1x512xf32>
    %c7 = arith.constant 7 : index
    %c0_39 = arith.constant 0 : index
    %137 = vector.load %arg3[%c7, %c0_39] : memref<8x512xf32, #tpu.memory_space<vmem>>, vector<1x512xf32>
    %138 = arith.addf %136, %137 : vector<1x512xf32>
    %139 = math.tanh %138 : vector<1x512xf32>
    %140 = vector.extract_strided_slice %139 {offsets = [0, 0], sizes = [1, 384], strides = [1, 1]} : vector<1x512xf32> to vector<1x384xf32>
    %cst_40 = arith.constant 5.000000e-01 : f32
    %141 = vector.broadcast %cst_40 : f32 to vector<1x384xf32>
    %142 = arith.mulf %140, %141 : vector<1x384xf32>
    %cst_41 = arith.constant 5.000000e-01 : f32
    %143 = vector.broadcast %cst_41 : f32 to vector<1x384xf32>
    %144 = arith.addf %142, %143 : vector<1x384xf32>
    %145 = vector.extract_strided_slice %144 {offsets = [0, 0], sizes = [1, 128], strides = [1, 1]} : vector<1x384xf32> to vector<1x128xf32>
    %146 = vector.extract_strided_slice %144 {offsets = [0, 128], sizes = [1, 128], strides = [1, 1]} : vector<1x384xf32> to vector<1x128xf32>
    %147 = vector.extract_strided_slice %144 {offsets = [0, 256], sizes = [1, 128], strides = [1, 1]} : vector<1x384xf32> to vector<1x128xf32>
    %148 = vector.extract_strided_slice %139 {offsets = [0, 384], sizes = [1, 128], strides = [1, 1]} : vector<1x512xf32> to vector<1x128xf32>
    %149 = arith.mulf %146, %133 : vector<1x128xf32>
    %150 = arith.mulf %145, %148 : vector<1x128xf32>
    %151 = arith.addf %149, %150 : vector<1x128xf32>
    %152 = math.tanh %151 : vector<1x128xf32>
    %153 = arith.mulf %147, %152 : vector<1x128xf32>
    %154 = vector.extract_strided_slice %153 {offsets = [0, 0], sizes = [1, 32], strides = [1, 1]} : vector<1x128xf32> to vector<1x32xf32>
    %c152 = arith.constant 152 : index
    %c0_42 = arith.constant 0 : index
    %155 = vector.load %arg1[%c152, %c0_42] : memref<208x512xf32, #tpu.memory_space<vmem>>, vector<32x128xf32>
    %cst_43 = arith.constant dense<0.000000e+00> : vector<1x128xf32>
    %156 = tpu.matmul %154, %155, %cst_43 {dimension_numbers = #tpu.dot_dimension_numbers<[1], [0], [0], [1], [0, 0, 1, 1], [], []>} : vector<1x32xf32>, vector<32x128xf32>, vector<1x128xf32> -> vector<1x128xf32>
    %c184 = arith.constant 184 : index
    %c0_44 = arith.constant 0 : index
    %157 = vector.load %arg1[%c184, %c0_44] : memref<208x512xf32, #tpu.memory_space<vmem>>, vector<1x128xf32>
    %158 = arith.addf %156, %157 : vector<1x128xf32>
    %159 = tpu.iota {dimensions = array<i32: 1>} : vector<1x128xi32>
    %c8_i32 = arith.constant 8 : i32
    %160 = vector.broadcast %c8_i32 : i32 to vector<1x128xi32>
    %161 = arith.cmpi slt, %159, %160 : vector<1x128xi32>
    %cst_45 = arith.constant -1.000000e+30 : f32
    %162 = vector.broadcast %cst_45 : f32 to vector<1x128xf32>
    %163 = arith.select %161, %158, %162 : vector<1x128xi1>, vector<1x128xf32>
    %cst_46 = arith.constant dense<0xFF800000> : vector<1xf32>
    %164 = vector.multi_reduction <maximumf>, %163, %cst_46 [1] : vector<1x128xf32> to vector<1xf32>
    %165 = vector.shape_cast %164 : vector<1xf32> to vector<1x1xf32>
    %166 = vector.broadcast %165 : vector<1x1xf32> to vector<1x128xf32>
    %167 = arith.subf %163, %166 : vector<1x128xf32>
    %168 = math.exp %167 : vector<1x128xf32>
    %cst_47 = arith.constant dense<0.000000e+00> : vector<1xf32>
    %169 = vector.multi_reduction <add>, %168, %cst_47 [1] : vector<1x128xf32> to vector<1xf32>
    %170 = vector.shape_cast %169 : vector<1xf32> to vector<1x1xf32>
    %171 = math.log %170 : vector<1x1xf32>
    %172 = arith.addf %165, %171 : vector<1x1xf32>
    %173 = vector.broadcast %172 : vector<1x1xf32> to vector<1x128xf32>
    %174 = arith.subf %158, %173 : vector<1x128xf32>
    %cst_48 = arith.constant 0.000000e+00 : f32
    %175 = vector.broadcast %cst_48 : f32 to vector<8x128xf32>
    %c0_49 = arith.constant 0 : index
    %c0_50 = arith.constant 0 : index
    %176 = vector.load %arg2[%c0_49, %c0_50] : memref<8x128xf32, #tpu.memory_space<vmem>>, vector<8x128xf32>
    tpu.vector_store %arg2[%c0_49, %c0_50], %175 {strides = array<i32>} : memref<8x128xf32, #tpu.memory_space<vmem>>, vector<8x128xf32>,
    %c0_51 = arith.constant 0 : index
    %c0_52 = arith.constant 0 : index
    %177 = vector.load %arg2[%c0_51, %c0_52] : memref<8x128xf32, #tpu.memory_space<vmem>>, vector<1x128xf32>
    tpu.vector_store %arg2[%c0_51, %c0_52], %174 {strides = array<i32>} : memref<8x128xf32, #tpu.memory_space<vmem>>, vector<1x128xf32>,
    %c1_53 = arith.constant 1 : index
    %c0_54 = arith.constant 0 : index
    %178 = vector.load %arg2[%c1_53, %c0_54] : memref<8x128xf32, #tpu.memory_space<vmem>>, vector<1x128xf32>
    tpu.vector_store %arg2[%c1_53, %c0_54], %153 {strides = array<i32>} : memref<8x128xf32, #tpu.memory_space<vmem>>, vector<1x128xf32>,
    %c2_55 = arith.constant 2 : index
    %c0_56 = arith.constant 0 : index
    %179 = vector.load %arg2[%c2_55, %c0_56] : memref<8x128xf32, #tpu.memory_space<vmem>>, vector<1x128xf32>
    tpu.vector_store %arg2[%c2_55, %c0_56], %151 {strides = array<i32>} : memref<8x128xf32, #tpu.memory_space<vmem>>, vector<1x128xf32>,
    return
  }
}

</mosaic_0001>

<llo_original>
// kernel: tpu_custom_call.1
$region0: #{tpu_custom_call.1}
  #allocation0 [shape = 'u32[]', space=smem, size = 0x4, offset = 0x4, fixed_abs, tag = 'smem constant byte address 0x4 - core index']
  #allocation1 [shape = 'u32[72,128]{1,0:T(1,128)}', space=vmem, size = 0x9000, scoped, tag = 'internal scratch']
  #allocation2 [shape = 'f32[8,512]{1,0:T(8,128)}', space=vmem, size = 0x4000, scoped, tag = 'scratch operand']
  %s0 = inlined_call_operand.hbm [shape: f32[8,16], index: 0, kind: input, shape index: {}]
  %s1 = inlined_call_operand.hbm [shape: f32[208,512], index: 1, kind: input, shape index: {}]
  %s2 = inlined_call_operand.hbm [shape: f32[8,128], index: 2, kind: output, shape index: {}]
  %s3 = sld [smem:[#allocation0]]
  $region26: #{tpu_custom_call.1} parent=0
    _
  %s5 = ssub.s32 1, %s3
  %s6 = scalar_select 0, %s5, %s3
  $region1: #{tpu_custom_call.1} parent=0
    #allocation3 [shape = 'u8[4096]{0}', space=vmem, size = 0x1000, scoped, tag = 'input window, operand 0, single buffered']
    #allocation4 [shape = 's32[1]{0}', space=sflag, size = 0x4, scoped, tag = 'scoped memory for tpu_custom_call.1']
    #allocation5 [shape = 's32[1]{0}', space=sflag, size = 0x4, scoped, tag = 'scoped memory for tpu_custom_call.1']
    #allocation6 [shape = 'u8[425984]{0}', space=vmem, size = 0x68000, scoped, tag = 'input window, operand 1, single buffered']
    #allocation7 [shape = 's32[1]{0}', space=sflag, size = 0x4, scoped, tag = 'scoped memory for tpu_custom_call.1']
    #allocation8 [shape = 'u8[4096]{0}', space=vmem, size = 0x1000, scoped, tag = 'output window, operand 0, single buffered']
    %7 = vsyncpa [#allocation4], 0
    %8 = vsyncpa [#allocation7], 0
    %9 = vsyncpa [#allocation5], 0
    // Predicated region
    $region2: #{tpu_custom_call.1} parent=1 // pred_check
      _
    $region3: #{tpu_custom_call.1} parent=1 // pred_check_branch
      %11 = sbr.rel (0) target = $region5
    $region4: #{tpu_custom_call.1} parent=1 // pred_region
      %13 = vsyncadd [#allocation4], 0
      %s15 = sshll.u32 %s0, 4
      %s16 = int_to_ptr.hbm [resolvable:$true] %s15
      %s17 = sshll.u32 [#allocation3], 4
      %s18 = int_to_ptr.vmem [resolvable:$true] %s17
      %20 = dma.hbm_to_vmem [thread:$0]  %s16, 128, %s18, [#allocation4]
    $region5: #{tpu_custom_call.1} parent=1 // pred_fallthru
      _
    // Predicated region
    $region6: #{tpu_custom_call.1} parent=1 // pred_check
      _
    $region7: #{tpu_custom_call.1} parent=1 // pred_check_branch
      %22 = sbr.rel (0) target = $region9
    $region8: #{tpu_custom_call.1} parent=1 // pred_region
      %24 = vsyncadd [#allocation7], 0
      %s25 = sshll.u32 %s1, 4
      %s26 = int_to_ptr.hbm [resolvable:$true] %s25
      %s27 = sshll.u32 [#allocation6], 4
      %s28 = int_to_ptr.vmem [resolvable:$true] %s27
      %33 = dma.hbm_to_vmem [thread:$0]  %s26, 13312, %s28, [#allocation7], 512, 512, 32
    $region9: #{tpu_custom_call.1} parent=1 // pred_fallthru
      _
    // Predicated region
    $region10: #{tpu_custom_call.1} parent=1 // pred_check
      _
    $region11: #{tpu_custom_call.1} parent=1 // pred_check_branch
      %35 = sbr.rel (0) target = $region13
    $region12: #{tpu_custom_call.1} parent=1 // pred_region
      %37 = dma.done [#allocation4], 128
    $region13: #{tpu_custom_call.1} parent=1 // pred_fallthru
      _
    // Predicated region
    $region14: #{tpu_custom_call.1} parent=1 // pred_check
      _
    $region15: #{tpu_custom_call.1} parent=1 // pred_check_branch
      %39 = sbr.rel (0) target = $region17
    $region16: #{tpu_custom_call.1} parent=1 // pred_region
      %41 = dma.done [#allocation7], 13312
    $region17: #{tpu_custom_call.1} parent=1 // pred_fallthru
      _
    %v42 = vld [vmem:[#allocation3] sm:$0xff]
    %v43 = vld [vmem:[#allocation6] sm:$0xff]
    %v44 = vld [vmem:[#allocation6 + $0x8] sm:$0xff]
    %v45 = vld [vmem:[#allocation6 + $0x10] sm:$0xff]
    %v46 = vld [vmem:[#allocation6 + $0x18] sm:$0xff]
    %v47 = vld [vmem:[#allocation6 + $0x20] sm:$0xff]
    %v48 = vld [vmem:[#allocation6 + $0x28] sm:$0xff]
    %v49 = vld [vmem:[#allocation6 + $0x30] sm:$0xff]
    %v50 = vld [vmem:[#allocation6 + $0x38] sm:$0xff]
    %s51 = scalar_lea.vmem [#allocation6], 576
    %v52 = vld [vmem:[%s51] ss:$8 sm:$0xf]
    %v54 = vperm.slane %v52, 0
    %v55 = vperm.slane %v52, 1
    %v56 = vperm.slane %v52, 2
    %v57 = vperm.slane %v52, 3
    %vm62 = vcmask 130048
    %v64 = vsel %vm62, %v42, 0
    %66 = vmatpush.msra.mxu0 0.0
    %67 = vmatpush.msra.mxu0 0.0
    %68 = vmatpush.msra.mxu0 0.0
    %69 = vmatpush.msra.mxu0 0.0
    %70 = vmatpush.msra.mxu0 0.0
    %71 = vmatpush.msra.mxu0 0.0
    %72 = vmatpush.msra.mxu0 0.0
    %73 = vmatpush.msra.mxu0 0.0
    %74 = vmatpush.msra.mxu0 0.0
    %75 = vmatpush.msra.mxu0 0.0
    %76 = vmatpush.msra.mxu0 0.0
    %77 = vmatpush.msra.mxu0 0.0
    %78 = vmatpush.msra.mxu0 0.0
    %79 = vmatpush.msra.mxu0 0.0
    %80 = vmatpush.msra.mxu0 %v47
    %81 = vmatpush.msra.mxu0 %v43
    %82 = vmatmul.f32.gmra.mxu0 %v64
    %v83 = vpop.f32.mrf.mxu0
    %v84 = vadd.f32 %v54, %v83
    %85 = vdwg.mxu0
    %86 = vmatpush.msra.mxu0 0.0
    %87 = vmatpush.msra.mxu0 0.0
    %88 = vmatpush.msra.mxu0 0.0
    %89 = vmatpush.msra.mxu0 0.0
    %90 = vmatpush.msra.mxu0 0.0
    %91 = vmatpush.msra.mxu0 0.0
    %92 = vmatpush.msra.mxu0 0.0
    %93 = vmatpush.msra.mxu0 0.0
    %94 = vmatpush.msra.mxu0 0.0
    %95 = vmatpush.msra.mxu0 0.0
    %96 = vmatpush.msra.mxu0 0.0
    %97 = vmatpush.msra.mxu0 0.0
    %98 = vmatpush.msra.mxu0 0.0
    %99 = vmatpush.msra.mxu0 0.0
    %100 = vmatpush.msra.mxu0 %v48
    %101 = vmatpush.msra.mxu0 %v44
    %102 = vmatmul.f32.gmra.mxu0 %v64
    %v103 = vpop.f32.mrf.mxu0
    %v104 = vadd.f32 %v55, %v103
    %105 = vdwg.mxu0
    %106 = vmatpush.msra.mxu0 0.0
    %107 = vmatpush.msra.mxu0 0.0
    %108 = vmatpush.msra.mxu0 0.0
    %109 = vmatpush.msra.mxu0 0.0
    %110 = vmatpush.msra.mxu0 0.0
    %111 = vmatpush.msra.mxu0 0.0
    %112 = vmatpush.msra.mxu0 0.0
    %113 = vmatpush.msra.mxu0 0.0
    %114 = vmatpush.msra.mxu0 0.0
    %115 = vmatpush.msra.mxu0 0.0
    %116 = vmatpush.msra.mxu0 0.0
    %117 = vmatpush.msra.mxu0 0.0
    %118 = vmatpush.msra.mxu0 0.0
    %119 = vmatpush.msra.mxu0 0.0
    %120 = vmatpush.msra.mxu0 %v49
    %121 = vmatpush.msra.mxu0 %v45
    %122 = vmatmul.f32.gmra.mxu0 %v64
    %v123 = vpop.f32.mrf.mxu0
    %v124 = vadd.f32 %v56, %v123
    %125 = vdwg.mxu0
    %126 = vmatpush.msra.mxu0 0.0
    %127 = vmatpush.msra.mxu0 0.0
    %128 = vmatpush.msra.mxu0 0.0
    %129 = vmatpush.msra.mxu0 0.0
    %130 = vmatpush.msra.mxu0 0.0
    %131 = vmatpush.msra.mxu0 0.0
    %132 = vmatpush.msra.mxu0 0.0
    %133 = vmatpush.msra.mxu0 0.0
    %134 = vmatpush.msra.mxu0 0.0
    %135 = vmatpush.msra.mxu0 0.0
    %136 = vmatpush.msra.mxu0 0.0
    %137 = vmatpush.msra.mxu0 0.0
    %138 = vmatpush.msra.mxu0 0.0
    %139 = vmatpush.msra.mxu0 0.0
    %140 = vmatpush.msra.mxu0 %v50
    %141 = vmatpush.msra.mxu0 %v46
    %142 = vmatmul.f32.gmra.mxu0 %v64
    %v143 = vpop.f32.mrf.mxu0
    %v144 = vadd.f32 %v57, %v143
    %145 = vdwg.mxu0
    %146 = vst [vmem:[#allocation2] sm:$0xff] %v84
    %147 = vst [vmem:[#allocation2 + $0x8] sm:$0xff] %v104
    %148 = vst [vmem:[#allocation2 + $0x10] sm:$0xff] %v124
    %149 = vst [vmem:[#allocation2 + $0x18] sm:$0xff] %v144
    %v150 = vld [vmem:[#allocation6 + $0x300] ss:$0 sm:$0xff]
    %v151 = vld [vmem:[#allocation6 + $0x320] ss:$0 sm:$0xff]
    %v152 = vld [vmem:[#allocation6 + $0x40] sm:$0xff]
    %v153 = vld [vmem:[#allocation6 + $0x48] sm:$0xff]
    %v154 = vld [vmem:[#allocation6 + $0x50] sm:$0xff]
    %v155 = vld [vmem:[#allocation6 + $0x58] sm:$0xff]
    %v156 = vld [vmem:[#allocation6 + $0x60] sm:$0xff]
    %v157 = vld [vmem:[#allocation6 + $0x68] sm:$0xff]
    %v158 = vld [vmem:[#allocation6 + $0x70] sm:$0xff]
    %v159 = vld [vmem:[#allocation6 + $0x78] sm:$0xff]
    %v160 = vld [vmem:[#allocation6 + $0x80] sm:$0xff]
    %v161 = vld [vmem:[#allocation6 + $0x88] sm:$0xff]
    %v162 = vld [vmem:[#allocation6 + $0x90] sm:$0xff]
    %v163 = vld [vmem:[#allocation6 + $0x98] sm:$0xff]
    %v164 = vld [vmem:[#allocation6 + $0xa0] sm:$0xff]
    %v165 = vld [vmem:[#allocation6 + $0xa8] sm:$0xff]
    %v166 = vld [vmem:[#allocation6 + $0xb0] sm:$0xff]
    %v167 = vld [vmem:[#allocation6 + $0xb8] sm:$0xff]
    %v168 = vld [vmem:[#allocation6 + $0xc0] sm:$0xff]
    %v169 = vld [vmem:[#allocation6 + $0xc8] sm:$0xff]
    %v170 = vld [vmem:[#allocation6 + $0xd0] sm:$0xff]
    %v171 = vld [vmem:[#allocation6 + $0xd8] sm:$0xff]
    %v172 = vld [vmem:[#allocation6 + $0xe0] sm:$0xff]
    %v173 = vld [vmem:[#allocation6 + $0xe8] sm:$0xff]
    %v174 = vld [vmem:[#allocation6 + $0xf0] sm:$0xff]
    %v175 = vld [vmem:[#allocation6 + $0xf8] sm:$0xff]
    %v176 = vld [vmem:[#allocation6 + $0x100] sm:$0xff]
    %v177 = vld [vmem:[#allocation6 + $0x108] sm:$0xff]
    %v178 = vld [vmem:[#allocation6 + $0x110] sm:$0xff]
    %v179 = vld [vmem:[#allocation6 + $0x118] sm:$0xff]
    %v180 = vld [vmem:[#allocation6 + $0x120] sm:$0xff]
    %v181 = vld [vmem:[#allocation6 + $0x128] sm:$0xff]
    %v182 = vld [vmem:[#allocation6 + $0x130] sm:$0xff]
    %v183 = vld [vmem:[#allocation6 + $0x138] sm:$0xff]
    %v184 = vld [vmem:[#allocation6 + $0x140] sm:$0xff]
    %v185 = vld [vmem:[#allocation6 + $0x148] sm:$0xff]
    %v186 = vld [vmem:[#allocation6 + $0x150] sm:$0xff]
    %v187 = vld [vmem:[#allocation6 + $0x158] sm:$0xff]
    %v188 = vld [vmem:[#allocation6 + $0x160] sm:$0xff]
    %v189 = vld [vmem:[#allocation6 + $0x168] sm:$0xff]
    %v190 = vld [vmem:[#allocation6 + $0x170] sm:$0xff]
    %v191 = vld [vmem:[#allocation6 + $0x178] sm:$0xff]
    %v192 = vld [vmem:[#allocation6 + $0x180] sm:$0xff]
    %v193 = vld [vmem:[#allocation6 + $0x188] sm:$0xff]
    %v194 = vld [vmem:[#allocation6 + $0x190] sm:$0xff]
    %v195 = vld [vmem:[#allocation6 + $0x198] sm:$0xff]
    %v196 = vld [vmem:[#allocation6 + $0x1a0] sm:$0xff]
    %v197 = vld [vmem:[#allocation6 + $0x1a8] sm:$0xff]
    %v198 = vld [vmem:[#allocation6 + $0x1b0] sm:$0xff]
    %v199 = vld [vmem:[#allocation6 + $0x1b8] sm:$0xff]
    %v200 = vld [vmem:[#allocation6 + $0x1c0] sm:$0xff]
    %v201 = vld [vmem:[#allocation6 + $0x1c8] sm:$0xff]
    %v202 = vld [vmem:[#allocation6 + $0x1d0] sm:$0xff]
    %v203 = vld [vmem:[#allocation6 + $0x1d8] sm:$0xff]
    %v204 = vld [vmem:[#allocation6 + $0x1e0] sm:$0xff]
    %v205 = vld [vmem:[#allocation6 + $0x1e8] sm:$0xff]
    %v206 = vld [vmem:[#allocation6 + $0x1f0] sm:$0xff]
    %v207 = vld [vmem:[#allocation6 + $0x1f8] sm:$0xff]
    %v208 = vld [vmem:[#allocation6 + $0x200] sm:$0xff]
    %v209 = vld [vmem:[#allocation6 + $0x208] sm:$0xff]
    %v210 = vld [vmem:[#allocation6 + $0x210] sm:$0xff]
    %v211 = vld [vmem:[#allocation6 + $0x218] sm:$0xff]
    %v212 = vld [vmem:[#allocation6 + $0x220] sm:$0xff]
    %v213 = vld [vmem:[#allocation6 + $0x228] sm:$0xff]
    %v214 = vld [vmem:[#allocation6 + $0x230] sm:$0xff]
    %v215 = vld [vmem:[#allocation6 + $0x238] sm:$0xff]
    %v216 = vld [vmem:[#allocation2] ss:$8 sm:$0xf]
    %v218 = vperm.slane %v216, 0
    %v219 = vperm.slane %v216, 1
    %v220 = vperm.slane %v216, 2
    %v221 = vperm.slane %v216, 3
    %226 = vmatpush.msra.mxu0 %v212
    %227 = vmatpush.msra.mxu0 %v208
    %228 = vmatpush.msra.mxu0 %v204
    %229 = vmatpush.msra.mxu0 %v200
    %230 = vmatpush.msra.mxu0 %v196
    %231 = vmatpush.msra.mxu0 %v192
    %232 = vmatpush.msra.mxu0 %v188
    %233 = vmatpush.msra.mxu0 %v184
    %234 = vmatpush.msra.mxu0 %v180
    %235 = vmatpush.msra.mxu0 %v176
    %236 = vmatpush.msra.mxu0 %v172
    %237 = vmatpush.msra.mxu0 %v168
    %238 = vmatpush.msra.mxu0 %v164
    %239 = vmatpush.msra.mxu0 %v160
    %240 = vmatpush.msra.mxu0 %v156
    %241 = vmatpush.msra.mxu0 %v152
    %242 = vmatmul.f32.gmra.mxu0 %v150
    %v243 = vpop.f32.mrf.mxu0
    %v244 = vadd.f32 %v218, %v243
    %245 = vdwg.mxu0
    %246 = vmatpush.msra.mxu0 %v213
    %247 = vmatpush.msra.mxu0 %v209
    %248 = vmatpush.msra.mxu0 %v205
    %249 = vmatpush.msra.mxu0 %v201
    %250 = vmatpush.msra.mxu0 %v197
    %251 = vmatpush.msra.mxu0 %v193
    %252 = vmatpush.msra.mxu0 %v189
    %253 = vmatpush.msra.mxu0 %v185
    %254 = vmatpush.msra.mxu0 %v181
    %255 = vmatpush.msra.mxu0 %v177
    %256 = vmatpush.msra.mxu0 %v173
    %257 = vmatpush.msra.mxu0 %v169
    %258 = vmatpush.msra.mxu0 %v165
    %259 = vmatpush.msra.mxu0 %v161
    %260 = vmatpush.msra.mxu0 %v157
    %261 = vmatpush.msra.mxu0 %v153
    %262 = vmatmul.f32.gmra.mxu0 %v150
    %v263 = vpop.f32.mrf.mxu0
    %v264 = vadd.f32 %v219, %v263
    %265 = vdwg.mxu0
    %266 = vmatpush.msra.mxu0 %v214
    %267 = vmatpush.msra.mxu0 %v210
    %268 = vmatpush.msra.mxu0 %v206
    %269 = vmatpush.msra.mxu0 %v202
    %270 = vmatpush.msra.mxu0 %v198
    %271 = vmatpush.msra.mxu0 %v194
    %272 = vmatpush.msra.mxu0 %v190
    %273 = vmatpush.msra.mxu0 %v186
    %274 = vmatpush.msra.mxu0 %v182
    %275 = vmatpush.msra.mxu0 %v178
    %276 = vmatpush.msra.mxu0 %v174
    %277 = vmatpush.msra.mxu0 %v170
    %278 = vmatpush.msra.mxu0 %v166
    %279 = vmatpush.msra.mxu0 %v162
    %280 = vmatpush.msra.mxu0 %v158
    %281 = vmatpush.msra.mxu0 %v154
    %282 = vmatmul.f32.gmra.mxu0 %v150
    %v283 = vpop.f32.mrf.mxu0
    %v284 = vadd.f32 %v220, %v283
    %285 = vdwg.mxu0
    %286 = vmatpush.msra.mxu0 %v215
    %287 = vmatpush.msra.mxu0 %v211
    %288 = vmatpush.msra.mxu0 %v207
    %289 = vmatpush.msra.mxu0 %v203
    %290 = vmatpush.msra.mxu0 %v199
    %291 = vmatpush.msra.mxu0 %v195
    %292 = vmatpush.msra.mxu0 %v191
    %293 = vmatpush.msra.mxu0 %v187
    %294 = vmatpush.msra.mxu0 %v183
    %295 = vmatpush.msra.mxu0 %v179
    %296 = vmatpush.msra.mxu0 %v175
    %297 = vmatpush.msra.mxu0 %v171
    %298 = vmatpush.msra.mxu0 %v167
    %299 = vmatpush.msra.mxu0 %v163
    %300 = vmatpush.msra.mxu0 %v159
    %301 = vmatpush.msra.mxu0 %v155
    %302 = vmatmul.f32.gmra.mxu0 %v150
    %v303 = vpop.f32.mrf.mxu0
    %v304 = vadd.f32 %v221, %v303
    %305 = vdwg.mxu0
    %v306 = vtanh.pop %v244
    %v307 = vtanh.pop %v264
    %v308 = vtanh.pop %v284
    %v309 = vtanh.pop %v304
    %v310 = vmul.f32 %v306, 0.5
    %v311 = vmul.f32 %v307, 0.5
    %v312 = vmul.f32 %v308, 0.5
    %v313 = vadd.f32 %v310, 0.5
    %v314 = vadd.f32 %v311, 0.5
    %v315 = vadd.f32 %v312, 0.5
    %v316 = vmul.f32 %v314, %v151
    %v317 = vmul.f32 %v313, %v309
    %v318 = vadd.f32 %v316, %v317
    %v319 = vtanh.pop %v318
    %v320 = vmul.f32 %v315, %v319
    %s321 = scalar_lea.vmem [#allocation2], 1
    %v322 = vld [vmem:[%s321] ss:$8 sm:$0xf]
    %v324 = vperm.slane %v322, 0
    %v325 = vperm.slane %v322, 1
    %v326 = vperm.slane %v322, 2
    %v327 = vperm.slane %v322, 3
    %332 = vmatpush.msra.mxu0 %v212
    %333 = vmatpush.msra.mxu0 %v208
    %334 = vmatpush.msra.mxu0 %v204
    %335 = vmatpush.msra.mxu0 %v200
    %336 = vmatpush.msra.mxu0 %v196
    %337 = vmatpush.msra.mxu0 %v192
    %338 = vmatpush.msra.mxu0 %v188
    %339 = vmatpush.msra.mxu0 %v184
    %340 = vmatpush.msra.mxu0 %v180
    %341 = vmatpush.msra.mxu0 %v176
    %342 = vmatpush.msra.mxu0 %v172
    %343 = vmatpush.msra.mxu0 %v168
    %344 = vmatpush.msra.mxu0 %v164
    %345 = vmatpush.msra.mxu0 %v160
    %346 = vmatpush.msra.mxu0 %v156
    %347 = vmatpush.msra.mxu0 %v152
    %348 = vmatmul.f32.gmra.mxu0 %v320
    %v349 = vpop.f32.mrf.mxu0
    %v350 = vadd.f32 %v324, %v349
    %351 = vdwg.mxu0
    %352 = vmatpush.msra.mxu0 %v213
    %353 = vmatpush.msra.mxu0 %v209
    %354 = vmatpush.msra.mxu0 %v205
    %355 = vmatpush.msra.mxu0 %v201
    %356 = vmatpush.msra.mxu0 %v197
    %357 = vmatpush.msra.mxu0 %v193
    %358 = vmatpush.msra.mxu0 %v189
    %359 = vmatpush.msra.mxu0 %v185
    %360 = vmatpush.msra.mxu0 %v181
    %361 = vmatpush.msra.mxu0 %v177
    %362 = vmatpush.msra.mxu0 %v173
    %363 = vmatpush.msra.mxu0 %v169
    %364 = vmatpush.msra.mxu0 %v165
    %365 = vmatpush.msra.mxu0 %v161
    %366 = vmatpush.msra.mxu0 %v157
    %367 = vmatpush.msra.mxu0 %v153
    %368 = vmatmul.f32.gmra.mxu0 %v320
    %v369 = vpop.f32.mrf.mxu0
    %v370 = vadd.f32 %v325, %v369
    %371 = vdwg.mxu0
    %372 = vmatpush.msra.mxu0 %v214
    %373 = vmatpush.msra.mxu0 %v210
    %374 = vmatpush.msra.mxu0 %v206
    %375 = vmatpush.msra.mxu0 %v202
    %376 = vmatpush.msra.mxu0 %v198
    %377 = vmatpush.msra.mxu0 %v194
    %378 = vmatpush.msra.mxu0 %v190
    %379 = vmatpush.msra.mxu0 %v186
    %380 = vmatpush.msra.mxu0 %v182
    %381 = vmatpush.msra.mxu0 %v178
    %382 = vmatpush.msra.mxu0 %v174
    %383 = vmatpush.msra.mxu0 %v170
    %384 = vmatpush.msra.mxu0 %v166
    %385 = vmatpush.msra.mxu0 %v162
    %386 = vmatpush.msra.mxu0 %v158
    %387 = vmatpush.msra.mxu0 %v154
    %388 = vmatmul.f32.gmra.mxu0 %v320
    %v389 = vpop.f32.mrf.mxu0
    %v390 = vadd.f32 %v326, %v389
    %391 = vdwg.mxu0
    %392 = vmatpush.msra.mxu0 %v215
    %393 = vmatpush.msra.mxu0 %v211
    %394 = vmatpush.msra.mxu0 %v207
    %395 = vmatpush.msra.mxu0 %v203
    %396 = vmatpush.msra.mxu0 %v199
    %397 = vmatpush.msra.mxu0 %v195
    %398 = vmatpush.msra.mxu0 %v191
    %399 = vmatpush.msra.mxu0 %v187
    %400 = vmatpush.msra.mxu0 %v183
    %401 = vmatpush.msra.mxu0 %v179
    %402 = vmatpush.msra.mxu0 %v175
    %403 = vmatpush.msra.mxu0 %v171
    %404 = vmatpush.msra.mxu0 %v167
    %405 = vmatpush.msra.mxu0 %v163
    %406 = vmatpush.msra.mxu0 %v159
    %407 = vmatpush.msra.mxu0 %v155
    %408 = vmatmul.f32.gmra.mxu0 %v320
    %v409 = vpop.f32.mrf.mxu0
    %v410 = vadd.f32 %v327, %v409
    %411 = vdwg.mxu0
    %v412 = vtanh.pop %v350
    %v413 = vtanh.pop %v370
    %v414 = vtanh.pop %v390
    %v415 = vtanh.pop %v410
    %v416 = vmul.f32 %v412, 0.5
    %v417 = vmul.f32 %v413, 0.5
    %v418 = vmul.f32 %v414, 0.5
    %v419 = vadd.f32 %v416, 0.5
    %v420 = vadd.f32 %v417, 0.5
    %v421 = vadd.f32 %v418, 0.5
    %v422 = vmul.f32 %v420, %v318
    %v423 = vmul.f32 %v419, %v415
    %v424 = vadd.f32 %v422, %v423
    %v425 = vtanh.pop %v424
    %v426 = vmul.f32 %v421, %v425
    %s427 = scalar_lea.vmem [#allocation2], 2
    %v428 = vld [vmem:[%s427] ss:$8 sm:$0xf]
    %v430 = vperm.slane %v428, 0
    %v431 = vperm.slane %v428, 1
    %v432 = vperm.slane %v428, 2
    %v433 = vperm.slane %v428, 3
    %438 = vmatpush.msra.mxu0 %v212
    %439 = vmatpush.msra.mxu0 %v208
    %440 = vmatpush.msra.mxu0 %v204
    %441 = vmatpush.msra.mxu0 %v200
    %442 = vmatpush.msra.mxu0 %v196
    %443 = vmatpush.msra.mxu0 %v192
    %444 = vmatpush.msra.mxu0 %v188
    %445 = vmatpush.msra.mxu0 %v184
    %446 = vmatpush.msra.mxu0 %v180
    %447 = vmatpush.msra.mxu0 %v176
    %448 = vmatpush.msra.mxu0 %v172
    %449 = vmatpush.msra.mxu0 %v168
    %450 = vmatpush.msra.mxu0 %v164
    %451 = vmatpush.msra.mxu0 %v160
    %452 = vmatpush.msra.mxu0 %v156
    %453 = vmatpush.msra.mxu0 %v152
    %454 = vmatmul.f32.gmra.mxu0 %v426
    %v455 = vpop.f32.mrf.mxu0
    %v456 = vadd.f32 %v430, %v455
    %457 = vdwg.mxu0
    %458 = vmatpush.msra.mxu0 %v213
    %459 = vmatpush.msra.mxu0 %v209
    %460 = vmatpush.msra.mxu0 %v205
    %461 = vmatpush.msra.mxu0 %v201
    %462 = vmatpush.msra.mxu0 %v197
    %463 = vmatpush.msra.mxu0 %v193
    %464 = vmatpush.msra.mxu0 %v189
    %465 = vmatpush.msra.mxu0 %v185
    %466 = vmatpush.msra.mxu0 %v181
    %467 = vmatpush.msra.mxu0 %v177
    %468 = vmatpush.msra.mxu0 %v173
    %469 = vmatpush.msra.mxu0 %v169
    %470 = vmatpush.msra.mxu0 %v165
    %471 = vmatpush.msra.mxu0 %v161
    %472 = vmatpush.msra.mxu0 %v157
    %473 = vmatpush.msra.mxu0 %v153
    %474 = vmatmul.f32.gmra.mxu0 %v426
    %v475 = vpop.f32.mrf.mxu0
    %v476 = vadd.f32 %v431, %v475
    %477 = vdwg.mxu0
    %478 = vmatpush.msra.mxu0 %v214
    %479 = vmatpush.msra.mxu0 %v210
    %480 = vmatpush.msra.mxu0 %v206
    %481 = vmatpush.msra.mxu0 %v202
    %482 = vmatpush.msra.mxu0 %v198
    %483 = vmatpush.msra.mxu0 %v194
    %484 = vmatpush.msra.mxu0 %v190
    %485 = vmatpush.msra.mxu0 %v186
    %486 = vmatpush.msra.mxu0 %v182
    %487 = vmatpush.msra.mxu0 %v178
    %488 = vmatpush.msra.mxu0 %v174
    %489 = vmatpush.msra.mxu0 %v170
    %490 = vmatpush.msra.mxu0 %v166
    %491 = vmatpush.msra.mxu0 %v162
    %492 = vmatpush.msra.mxu0 %v158
    %493 = vmatpush.msra.mxu0 %v154
    %494 = vmatmul.f32.gmra.mxu0 %v426
    %v495 = vpop.f32.mrf.mxu0
    %v496 = vadd.f32 %v432, %v495
    %497 = vdwg.mxu0
    %498 = vmatpush.msra.mxu0 %v215
    %499 = vmatpush.msra.mxu0 %v211
    %500 = vmatpush.msra.mxu0 %v207
    %501 = vmatpush.msra.mxu0 %v203
    %502 = vmatpush.msra.mxu0 %v199
    %503 = vmatpush.msra.mxu0 %v195
    %504 = vmatpush.msra.mxu0 %v191
    %505 = vmatpush.msra.mxu0 %v187
    %506 = vmatpush.msra.mxu0 %v183
    %507 = vmatpush.msra.mxu0 %v179
    %508 = vmatpush.msra.mxu0 %v175
    %509 = vmatpush.msra.mxu0 %v171
    %510 = vmatpush.msra.mxu0 %v167
    %511 = vmatpush.msra.mxu0 %v163
    %512 = vmatpush.msra.mxu0 %v159
    %513 = vmatpush.msra.mxu0 %v155
    %514 = vmatmul.f32.gmra.mxu0 %v426
    %v515 = vpop.f32.mrf.mxu0
    %v516 = vadd.f32 %v433, %v515
    %517 = vdwg.mxu0
    %v518 = vtanh.pop %v456
    %v519 = vtanh.pop %v476
    %v520 = vtanh.pop %v496
    %v521 = vtanh.pop %v516
    %v522 = vmul.f32 %v518, 0.5
    %v523 = vmul.f32 %v519, 0.5
    %v524 = vmul.f32 %v520, 0.5
    %v525 = vadd.f32 %v522, 0.5
    %v526 = vadd.f32 %v523, 0.5
    %v527 = vadd.f32 %v524, 0.5
    %v528 = vmul.f32 %v526, %v424
    %v529 = vmul.f32 %v525, %v521
    %v530 = vadd.f32 %v528, %v529
    %v531 = vtanh.pop %v530
    %v532 = vmul.f32 %v527, %v531
    %s533 = scalar_lea.vmem [#allocation2], 3
    %v534 = vld [vmem:[%s533] ss:$8 sm:$0xf]
    %v536 = vperm.slane %v534, 0
    %v537 = vperm.slane %v534, 1
    %v538 = vperm.slane %v534, 2
    %v539 = vperm.slane %v534, 3
    %544 = vmatpush.msra.mxu0 %v212
    %545 = vmatpush.msra.mxu0 %v208
    %546 = vmatpush.msra.mxu0 %v204
    %547 = vmatpush.msra.mxu0 %v200
    %548 = vmatpush.msra.mxu0 %v196
    %549 = vmatpush.msra.mxu0 %v192
    %550 = vmatpush.msra.mxu0 %v188
    %551 = vmatpush.msra.mxu0 %v184
    %552 = vmatpush.msra.mxu0 %v180
    %553 = vmatpush.msra.mxu0 %v176
    %554 = vmatpush.msra.mxu0 %v172
    %555 = vmatpush.msra.mxu0 %v168
    %556 = vmatpush.msra.mxu0 %v164
    %557 = vmatpush.msra.mxu0 %v160
    %558 = vmatpush.msra.mxu0 %v156
    %559 = vmatpush.msra.mxu0 %v152
    %560 = vmatmul.f32.gmra.mxu0 %v532
    %v561 = vpop.f32.mrf.mxu0
    %v562 = vadd.f32 %v536, %v561
    %563 = vdwg.mxu0
    %564 = vmatpush.msra.mxu0 %v213
    %565 = vmatpush.msra.mxu0 %v209
    %566 = vmatpush.msra.mxu0 %v205
    %567 = vmatpush.msra.mxu0 %v201
    %568 = vmatpush.msra.mxu0 %v197
    %569 = vmatpush.msra.mxu0 %v193
    %570 = vmatpush.msra.mxu0 %v189
    %571 = vmatpush.msra.mxu0 %v185
    %572 = vmatpush.msra.mxu0 %v181
    %573 = vmatpush.msra.mxu0 %v177
    %574 = vmatpush.msra.mxu0 %v173
    %575 = vmatpush.msra.mxu0 %v169
    %576 = vmatpush.msra.mxu0 %v165
    %577 = vmatpush.msra.mxu0 %v161
    %578 = vmatpush.msra.mxu0 %v157
    %579 = vmatpush.msra.mxu0 %v153
    %580 = vmatmul.f32.gmra.mxu0 %v532
    %v581 = vpop.f32.mrf.mxu0
    %v582 = vadd.f32 %v537, %v581
    %583 = vdwg.mxu0
    %584 = vmatpush.msra.mxu0 %v214
    %585 = vmatpush.msra.mxu0 %v210
    %586 = vmatpush.msra.mxu0 %v206
    %587 = vmatpush.msra.mxu0 %v202
    %588 = vmatpush.msra.mxu0 %v198
    %589 = vmatpush.msra.mxu0 %v194
    %590 = vmatpush.msra.mxu0 %v190
    %591 = vmatpush.msra.mxu0 %v186
    %592 = vmatpush.msra.mxu0 %v182
    %593 = vmatpush.msra.mxu0 %v178
    %594 = vmatpush.msra.mxu0 %v174
    %595 = vmatpush.msra.mxu0 %v170
    %596 = vmatpush.msra.mxu0 %v166
    %597 = vmatpush.msra.mxu0 %v162
    %598 = vmatpush.msra.mxu0 %v158
    %599 = vmatpush.msra.mxu0 %v154
    %600 = vmatmul.f32.gmra.mxu0 %v532
    %v601 = vpop.f32.mrf.mxu0
    %v602 = vadd.f32 %v538, %v601
    %603 = vdwg.mxu0
    %604 = vmatpush.msra.mxu0 %v215
    %605 = vmatpush.msra.mxu0 %v211
    %606 = vmatpush.msra.mxu0 %v207
    %607 = vmatpush.msra.mxu0 %v203
    %608 = vmatpush.msra.mxu0 %v199
    %609 = vmatpush.msra.mxu0 %v195
    %610 = vmatpush.msra.mxu0 %v191
    %611 = vmatpush.msra.mxu0 %v187
    %612 = vmatpush.msra.mxu0 %v183
    %613 = vmatpush.msra.mxu0 %v179
    %614 = vmatpush.msra.mxu0 %v175
    %615 = vmatpush.msra.mxu0 %v171
    %616 = vmatpush.msra.mxu0 %v167
    %617 = vmatpush.msra.mxu0 %v163
    %618 = vmatpush.msra.mxu0 %v159
    %619 = vmatpush.msra.mxu0 %v155
    %620 = vmatmul.f32.gmra.mxu0 %v532
    %v621 = vpop.f32.mrf.mxu0
    %v622 = vadd.f32 %v539, %v621
    %623 = vdwg.mxu0
    %v624 = vtanh.pop %v562
    %v625 = vtanh.pop %v582
    %v626 = vtanh.pop %v602
    %v627 = vtanh.pop %v622
    %v628 = vmul.f32 %v624, 0.5
    %v629 = vmul.f32 %v625, 0.5
    %v630 = vmul.f32 %v626, 0.5
    %v631 = vadd.f32 %v628, 0.5
    %v632 = vadd.f32 %v629, 0.5
    %v633 = vadd.f32 %v630, 0.5
    %v634 = vmul.f32 %v632, %v530
    %v635 = vmul.f32 %v631, %v627
    %v636 = vadd.f32 %v634, %v635
    %v637 = vtanh.pop %v636
    %v638 = vmul.f32 %v633, %v637
    %s639 = scalar_lea.vmem [#allocation2], 4
    %v640 = vld [vmem:[%s639] ss:$8 sm:$0xf]
    %v642 = vperm.slane %v640, 0
    %v643 = vperm.slane %v640, 1
    %v644 = vperm.slane %v640, 2
    %v645 = vperm.slane %v640, 3
    %650 = vmatpush.msra.mxu0 %v212
    %651 = vmatpush.msra.mxu0 %v208
    %652 = vmatpush.msra.mxu0 %v204
    %653 = vmatpush.msra.mxu0 %v200
    %654 = vmatpush.msra.mxu0 %v196
    %655 = vmatpush.msra.mxu0 %v192
    %656 = vmatpush.msra.mxu0 %v188
    %657 = vmatpush.msra.mxu0 %v184
    %658 = vmatpush.msra.mxu0 %v180
    %659 = vmatpush.msra.mxu0 %v176
    %660 = vmatpush.msra.mxu0 %v172
    %661 = vmatpush.msra.mxu0 %v168
    %662 = vmatpush.msra.mxu0 %v164
    %663 = vmatpush.msra.mxu0 %v160
    %664 = vmatpush.msra.mxu0 %v156
    %665 = vmatpush.msra.mxu0 %v152
    %666 = vmatmul.f32.gmra.mxu0 %v638
    %v667 = vpop.f32.mrf.mxu0
    %v668 = vadd.f32 %v642, %v667
    %669 = vdwg.mxu0
    %670 = vmatpush.msra.mxu0 %v213
    %671 = vmatpush.msra.mxu0 %v209
    %672 = vmatpush.msra.mxu0 %v205
    %673 = vmatpush.msra.mxu0 %v201
    %674 = vmatpush.msra.mxu0 %v197
    %675 = vmatpush.msra.mxu0 %v193
    %676 = vmatpush.msra.mxu0 %v189
    %677 = vmatpush.msra.mxu0 %v185
    %678 = vmatpush.msra.mxu0 %v181
    %679 = vmatpush.msra.mxu0 %v177
    %680 = vmatpush.msra.mxu0 %v173
    %681 = vmatpush.msra.mxu0 %v169
    %682 = vmatpush.msra.mxu0 %v165
    %683 = vmatpush.msra.mxu0 %v161
    %684 = vmatpush.msra.mxu0 %v157
    %685 = vmatpush.msra.mxu0 %v153
    %686 = vmatmul.f32.gmra.mxu0 %v638
    %v687 = vpop.f32.mrf.mxu0
    %v688 = vadd.f32 %v643, %v687
    %689 = vdwg.mxu0
    %690 = vmatpush.msra.mxu0 %v214
    %691 = vmatpush.msra.mxu0 %v210
    %692 = vmatpush.msra.mxu0 %v206
    %693 = vmatpush.msra.mxu0 %v202
    %694 = vmatpush.msra.mxu0 %v198
    %695 = vmatpush.msra.mxu0 %v194
    %696 = vmatpush.msra.mxu0 %v190
    %697 = vmatpush.msra.mxu0 %v186
    %698 = vmatpush.msra.mxu0 %v182
    %699 = vmatpush.msra.mxu0 %v178
    %700 = vmatpush.msra.mxu0 %v174
    %701 = vmatpush.msra.mxu0 %v170
    %702 = vmatpush.msra.mxu0 %v166
    %703 = vmatpush.msra.mxu0 %v162
    %704 = vmatpush.msra.mxu0 %v158
    %705 = vmatpush.msra.mxu0 %v154
    %706 = vmatmul.f32.gmra.mxu0 %v638
    %v707 = vpop.f32.mrf.mxu0
    %v708 = vadd.f32 %v644, %v707
    %709 = vdwg.mxu0
    %710 = vmatpush.msra.mxu0 %v215
    %711 = vmatpush.msra.mxu0 %v211
    %712 = vmatpush.msra.mxu0 %v207
    %713 = vmatpush.msra.mxu0 %v203
    %714 = vmatpush.msra.mxu0 %v199
    %715 = vmatpush.msra.mxu0 %v195
    %716 = vmatpush.msra.mxu0 %v191
    %717 = vmatpush.msra.mxu0 %v187
    %718 = vmatpush.msra.mxu0 %v183
    %719 = vmatpush.msra.mxu0 %v179
    %720 = vmatpush.msra.mxu0 %v175
    %721 = vmatpush.msra.mxu0 %v171
    %722 = vmatpush.msra.mxu0 %v167
    %723 = vmatpush.msra.mxu0 %v163
    %724 = vmatpush.msra.mxu0 %v159
    %725 = vmatpush.msra.mxu0 %v155
    %726 = vmatmul.f32.gmra.mxu0 %v638
    %v727 = vpop.f32.mrf.mxu0
    %v728 = vadd.f32 %v645, %v727
    %729 = vdwg.mxu0
    %v730 = vtanh.pop %v668
    %v731 = vtanh.pop %v688
    %v732 = vtanh.pop %v708
    %v733 = vtanh.pop %v728
    %v734 = vmul.f32 %v730, 0.5
    %v735 = vmul.f32 %v731, 0.5
    %v736 = vmul.f32 %v732, 0.5
    %v737 = vadd.f32 %v734, 0.5
    %v738 = vadd.f32 %v735, 0.5
    %v739 = vadd.f32 %v736, 0.5
    %v740 = vmul.f32 %v738, %v636
    %v741 = vmul.f32 %v737, %v733
    %v742 = vadd.f32 %v740, %v741
    %v743 = vtanh.pop %v742
    %v744 = vmul.f32 %v739, %v743
    %s745 = scalar_lea.vmem [#allocation2], 5
    %v746 = vld [vmem:[%s745] ss:$8 sm:$0xf]
    %v748 = vperm.slane %v746, 0
    %v749 = vperm.slane %v746, 1
    %v750 = vperm.slane %v746, 2
    %v751 = vperm.slane %v746, 3
    %756 = vmatpush.msra.mxu0 %v212
    %757 = vmatpush.msra.mxu0 %v208
    %758 = vmatpush.msra.mxu0 %v204
    %759 = vmatpush.msra.mxu0 %v200
    %760 = vmatpush.msra.mxu0 %v196
    %761 = vmatpush.msra.mxu0 %v192
    %762 = vmatpush.msra.mxu0 %v188
    %763 = vmatpush.msra.mxu0 %v184
    %764 = vmatpush.msra.mxu0 %v180
    %765 = vmatpush.msra.mxu0 %v176
    %766 = vmatpush.msra.mxu0 %v172
    %767 = vmatpush.msra.mxu0 %v168
    %768 = vmatpush.msra.mxu0 %v164
    %769 = vmatpush.msra.mxu0 %v160
    %770 = vmatpush.msra.mxu0 %v156
    %771 = vmatpush.msra.mxu0 %v152
    %772 = vmatmul.f32.gmra.mxu0 %v744
    %v773 = vpop.f32.mrf.mxu0
    %v774 = vadd.f32 %v748, %v773
    %775 = vdwg.mxu0
    %776 = vmatpush.msra.mxu0 %v213
    %777 = vmatpush.msra.mxu0 %v209
    %778 = vmatpush.msra.mxu0 %v205
    %779 = vmatpush.msra.mxu0 %v201
    %780 = vmatpush.msra.mxu0 %v197
    %781 = vmatpush.msra.mxu0 %v193
    %782 = vmatpush.msra.mxu0 %v189
    %783 = vmatpush.msra.mxu0 %v185
    %784 = vmatpush.msra.mxu0 %v181
    %785 = vmatpush.msra.mxu0 %v177
    %786 = vmatpush.msra.mxu0 %v173
    %787 = vmatpush.msra.mxu0 %v169
    %788 = vmatpush.msra.mxu0 %v165
    %789 = vmatpush.msra.mxu0 %v161
    %790 = vmatpush.msra.mxu0 %v157
    %791 = vmatpush.msra.mxu0 %v153
    %792 = vmatmul.f32.gmra.mxu0 %v744
    %v793 = vpop.f32.mrf.mxu0
    %v794 = vadd.f32 %v749, %v793
    %795 = vdwg.mxu0
    %796 = vmatpush.msra.mxu0 %v214
    %797 = vmatpush.msra.mxu0 %v210
    %798 = vmatpush.msra.mxu0 %v206
    %799 = vmatpush.msra.mxu0 %v202
    %800 = vmatpush.msra.mxu0 %v198
    %801 = vmatpush.msra.mxu0 %v194
    %802 = vmatpush.msra.mxu0 %v190
    %803 = vmatpush.msra.mxu0 %v186
    %804 = vmatpush.msra.mxu0 %v182
    %805 = vmatpush.msra.mxu0 %v178
    %806 = vmatpush.msra.mxu0 %v174
    %807 = vmatpush.msra.mxu0 %v170
    %808 = vmatpush.msra.mxu0 %v166
    %809 = vmatpush.msra.mxu0 %v162
    %810 = vmatpush.msra.mxu0 %v158
    %811 = vmatpush.msra.mxu0 %v154
    %812 = vmatmul.f32.gmra.mxu0 %v744
    %v813 = vpop.f32.mrf.mxu0
    %v814 = vadd.f32 %v750, %v813
    %815 = vdwg.mxu0
    %816 = vmatpush.msra.mxu0 %v215
    %817 = vmatpush.msra.mxu0 %v211
    %818 = vmatpush.msra.mxu0 %v207
    %819 = vmatpush.msra.mxu0 %v203
    %820 = vmatpush.msra.mxu0 %v199
    %821 = vmatpush.msra.mxu0 %v195
    %822 = vmatpush.msra.mxu0 %v191
    %823 = vmatpush.msra.mxu0 %v187
    %824 = vmatpush.msra.mxu0 %v183
    %825 = vmatpush.msra.mxu0 %v179
    %826 = vmatpush.msra.mxu0 %v175
    %827 = vmatpush.msra.mxu0 %v171
    %828 = vmatpush.msra.mxu0 %v167
    %829 = vmatpush.msra.mxu0 %v163
    %830 = vmatpush.msra.mxu0 %v159
    %831 = vmatpush.msra.mxu0 %v155
    %832 = vmatmul.f32.gmra.mxu0 %v744
    %v833 = vpop.f32.mrf.mxu0
    %v834 = vadd.f32 %v751, %v833
    %835 = vdwg.mxu0
    %v836 = vtanh.pop %v774
    %v837 = vtanh.pop %v794
    %v838 = vtanh.pop %v814
    %v839 = vtanh.pop %v834
    %v840 = vmul.f32 %v836, 0.5
    %v841 = vmul.f32 %v837, 0.5
    %v842 = vmul.f32 %v838, 0.5
    %v843 = vadd.f32 %v840, 0.5
    %v844 = vadd.f32 %v841, 0.5
    %v845 = vadd.f32 %v842, 0.5
    %v846 = vmul.f32 %v844, %v742
    %v847 = vmul.f32 %v843, %v839
    %v848 = vadd.f32 %v846, %v847
    %v849 = vtanh.pop %v848
    %v850 = vmul.f32 %v845, %v849
    %s851 = scalar_lea.vmem [#allocation2], 6
    %v852 = vld [vmem:[%s851] ss:$8 sm:$0xf]
    %v854 = vperm.slane %v852, 0
    %v855 = vperm.slane %v852, 1
    %v856 = vperm.slane %v852, 2
    %v857 = vperm.slane %v852, 3
    %862 = vmatpush.msra.mxu0 %v212
    %863 = vmatpush.msra.mxu0 %v208
    %864 = vmatpush.msra.mxu0 %v204
    %865 = vmatpush.msra.mxu0 %v200
    %866 = vmatpush.msra.mxu0 %v196
    %867 = vmatpush.msra.mxu0 %v192
    %868 = vmatpush.msra.mxu0 %v188
    %869 = vmatpush.msra.mxu0 %v184
    %870 = vmatpush.msra.mxu0 %v180
    %871 = vmatpush.msra.mxu0 %v176
    %872 = vmatpush.msra.mxu0 %v172
    %873 = vmatpush.msra.mxu0 %v168
    %874 = vmatpush.msra.mxu0 %v164
    %875 = vmatpush.msra.mxu0 %v160
    %876 = vmatpush.msra.mxu0 %v156
    %877 = vmatpush.msra.mxu0 %v152
    %878 = vmatmul.f32.gmra.mxu0 %v850
    %v879 = vpop.f32.mrf.mxu0
    %v880 = vadd.f32 %v854, %v879
    %881 = vdwg.mxu0
    %882 = vmatpush.msra.mxu0 %v213
    %883 = vmatpush.msra.mxu0 %v209
    %884 = vmatpush.msra.mxu0 %v205
    %885 = vmatpush.msra.mxu0 %v201
    %886 = vmatpush.msra.mxu0 %v197
    %887 = vmatpush.msra.mxu0 %v193
    %888 = vmatpush.msra.mxu0 %v189
    %889 = vmatpush.msra.mxu0 %v185
    %890 = vmatpush.msra.mxu0 %v181
    %891 = vmatpush.msra.mxu0 %v177
    %892 = vmatpush.msra.mxu0 %v173
    %893 = vmatpush.msra.mxu0 %v169
    %894 = vmatpush.msra.mxu0 %v165
    %895 = vmatpush.msra.mxu0 %v161
    %896 = vmatpush.msra.mxu0 %v157
    %897 = vmatpush.msra.mxu0 %v153
    %898 = vmatmul.f32.gmra.mxu0 %v850
    %v899 = vpop.f32.mrf.mxu0
    %v900 = vadd.f32 %v855, %v899
    %901 = vdwg.mxu0
    %902 = vmatpush.msra.mxu0 %v214
    %903 = vmatpush.msra.mxu0 %v210
    %904 = vmatpush.msra.mxu0 %v206
    %905 = vmatpush.msra.mxu0 %v202
    %906 = vmatpush.msra.mxu0 %v198
    %907 = vmatpush.msra.mxu0 %v194
    %908 = vmatpush.msra.mxu0 %v190
    %909 = vmatpush.msra.mxu0 %v186
    %910 = vmatpush.msra.mxu0 %v182
    %911 = vmatpush.msra.mxu0 %v178
    %912 = vmatpush.msra.mxu0 %v174
    %913 = vmatpush.msra.mxu0 %v170
    %914 = vmatpush.msra.mxu0 %v166
    %915 = vmatpush.msra.mxu0 %v162
    %916 = vmatpush.msra.mxu0 %v158
    %917 = vmatpush.msra.mxu0 %v154
    %918 = vmatmul.f32.gmra.mxu0 %v850
    %v919 = vpop.f32.mrf.mxu0
    %v920 = vadd.f32 %v856, %v919
    %921 = vdwg.mxu0
    %922 = vmatpush.msra.mxu0 %v215
    %923 = vmatpush.msra.mxu0 %v211
    %924 = vmatpush.msra.mxu0 %v207
    %925 = vmatpush.msra.mxu0 %v203
    %926 = vmatpush.msra.mxu0 %v199
    %927 = vmatpush.msra.mxu0 %v195
    %928 = vmatpush.msra.mxu0 %v191
    %929 = vmatpush.msra.mxu0 %v187
    %930 = vmatpush.msra.mxu0 %v183
    %931 = vmatpush.msra.mxu0 %v179
    %932 = vmatpush.msra.mxu0 %v175
    %933 = vmatpush.msra.mxu0 %v171
    %934 = vmatpush.msra.mxu0 %v167
    %935 = vmatpush.msra.mxu0 %v163
    %936 = vmatpush.msra.mxu0 %v159
    %937 = vmatpush.msra.mxu0 %v155
    %938 = vmatmul.f32.gmra.mxu0 %v850
    %v939 = vpop.f32.mrf.mxu0
    %v940 = vadd.f32 %v857, %v939
    %941 = vdwg.mxu0
    %v942 = vtanh.pop %v880
    %v943 = vtanh.pop %v900
    %v944 = vtanh.pop %v920
    %v945 = vtanh.pop %v940
    %v946 = vmul.f32 %v942, 0.5
    %v947 = vmul.f32 %v943, 0.5
    %v948 = vmul.f32 %v944, 0.5
    %v949 = vadd.f32 %v946, 0.5
    %v950 = vadd.f32 %v947, 0.5
    %v951 = vadd.f32 %v948, 0.5
    %v952 = vmul.f32 %v950, %v848
    %v953 = vmul.f32 %v949, %v945
    %v954 = vadd.f32 %v952, %v953
    %v955 = vtanh.pop %v954
    %v956 = vmul.f32 %v951, %v955
    %s957 = scalar_lea.vmem [#allocation2], 7
    %v958 = vld [vmem:[%s957] ss:$8 sm:$0xf]
    %v960 = vperm.slane %v958, 0
    %v961 = vperm.slane %v958, 1
    %v962 = vperm.slane %v958, 2
    %v963 = vperm.slane %v958, 3
    %968 = vmatpush.msra.mxu0 %v212
    %969 = vmatpush.msra.mxu0 %v208
    %970 = vmatpush.msra.mxu0 %v204
    %971 = vmatpush.msra.mxu0 %v200
    %972 = vmatpush.msra.mxu0 %v196
    %973 = vmatpush.msra.mxu0 %v192
    %974 = vmatpush.msra.mxu0 %v188
    %975 = vmatpush.msra.mxu0 %v184
    %976 = vmatpush.msra.mxu0 %v180
    %977 = vmatpush.msra.mxu0 %v176
    %978 = vmatpush.msra.mxu0 %v172
    %979 = vmatpush.msra.mxu0 %v168
    %980 = vmatpush.msra.mxu0 %v164
    %981 = vmatpush.msra.mxu0 %v160
    %982 = vmatpush.msra.mxu0 %v156
    %983 = vmatpush.msra.mxu0 %v152
    %984 = vmatmul.f32.gmra.mxu0 %v956
    %v985 = vpop.f32.mrf.mxu0
    %v986 = vadd.f32 %v960, %v985
    %987 = vdwg.mxu0
    %988 = vmatpush.msra.mxu0 %v213
    %989 = vmatpush.msra.mxu0 %v209
    %990 = vmatpush.msra.mxu0 %v205
    %991 = vmatpush.msra.mxu0 %v201
    %992 = vmatpush.msra.mxu0 %v197
    %993 = vmatpush.msra.mxu0 %v193
    %994 = vmatpush.msra.mxu0 %v189
    %995 = vmatpush.msra.mxu0 %v185
    %996 = vmatpush.msra.mxu0 %v181
    %997 = vmatpush.msra.mxu0 %v177
    %998 = vmatpush.msra.mxu0 %v173
    %999 = vmatpush.msra.mxu0 %v169
    %1000 = vmatpush.msra.mxu0 %v165
    %1001 = vmatpush.msra.mxu0 %v161
    %1002 = vmatpush.msra.mxu0 %v157
    %1003 = vmatpush.msra.mxu0 %v153
    %1004 = vmatmul.f32.gmra.mxu0 %v956
    %v1005 = vpop.f32.mrf.mxu0
    %v1006 = vadd.f32 %v961, %v1005
    %1007 = vdwg.mxu0
    %1008 = vmatpush.msra.mxu0 %v214
    %1009 = vmatpush.msra.mxu0 %v210
    %1010 = vmatpush.msra.mxu0 %v206
    %1011 = vmatpush.msra.mxu0 %v202
    %1012 = vmatpush.msra.mxu0 %v198
    %1013 = vmatpush.msra.mxu0 %v194
    %1014 = vmatpush.msra.mxu0 %v190
    %1015 = vmatpush.msra.mxu0 %v186
    %1016 = vmatpush.msra.mxu0 %v182
    %1017 = vmatpush.msra.mxu0 %v178
    %1018 = vmatpush.msra.mxu0 %v174
    %1019 = vmatpush.msra.mxu0 %v170
    %1020 = vmatpush.msra.mxu0 %v166
    %1021 = vmatpush.msra.mxu0 %v162
    %1022 = vmatpush.msra.mxu0 %v158
    %1023 = vmatpush.msra.mxu0 %v154
    %1024 = vmatmul.f32.gmra.mxu0 %v956
    %v1025 = vpop.f32.mrf.mxu0
    %v1026 = vadd.f32 %v962, %v1025
    %1027 = vdwg.mxu0
    %1028 = vmatpush.msra.mxu0 %v215
    %1029 = vmatpush.msra.mxu0 %v211
    %1030 = vmatpush.msra.mxu0 %v207
    %1031 = vmatpush.msra.mxu0 %v203
    %1032 = vmatpush.msra.mxu0 %v199
    %1033 = vmatpush.msra.mxu0 %v195
    %1034 = vmatpush.msra.mxu0 %v191
    %1035 = vmatpush.msra.mxu0 %v187
    %1036 = vmatpush.msra.mxu0 %v183
    %1037 = vmatpush.msra.mxu0 %v179
    %1038 = vmatpush.msra.mxu0 %v175
    %1039 = vmatpush.msra.mxu0 %v171
    %1040 = vmatpush.msra.mxu0 %v167
    %1041 = vmatpush.msra.mxu0 %v163
    %1042 = vmatpush.msra.mxu0 %v159
    %1043 = vmatpush.msra.mxu0 %v155
    %1044 = vmatmul.f32.gmra.mxu0 %v956
    %v1045 = vpop.f32.mrf.mxu0
    %v1046 = vadd.f32 %v963, %v1045
    %1047 = vdwg.mxu0
    %v1048 = vtanh.pop %v986
    %v1049 = vtanh.pop %v1006
    %v1050 = vtanh.pop %v1026
    %v1051 = vtanh.pop %v1046
    %v1052 = vmul.f32 %v1048, 0.5
    %v1053 = vmul.f32 %v1049, 0.5
    %v1054 = vmul.f32 %v1050, 0.5
    %v1055 = vadd.f32 %v1052, 0.5
    %v1056 = vadd.f32 %v1053, 0.5
    %v1057 = vadd.f32 %v1054, 0.5
    %v1058 = vmul.f32 %v1056, %v954
    %v1059 = vmul.f32 %v1055, %v1051
    %v1060 = vadd.f32 %v1058, %v1059
    %v1061 = vtanh.pop %v1060
    %v1062 = vmul.f32 %v1057, %v1061
    %v1063 = vld [vmem:[#allocation6 + $0x260] sm:$0xff]
    %v1064 = vld [vmem:[#allocation6 + $0x280] sm:$0xff]
    %v1065 = vld [vmem:[#allocation6 + $0x2a0] sm:$0xff]
    %v1066 = vld [vmem:[#allocation6 + $0x2c0] sm:$0xff]
    %v1067 = vld [vmem:[#allocation6 + $0x2e0] ss:$0 sm:$0xff]
    %vm1068 = vcmask 261120
    %v1070 = vsel %vm1068, %v1062, 0
    %1072 = vmatpush.msra.mxu0 0.0
    %1073 = vmatpush.msra.mxu0 0.0
    %1074 = vmatpush.msra.mxu0 0.0
    %1075 = vmatpush.msra.mxu0 0.0
    %1076 = vmatpush.msra.mxu0 0.0
    %1077 = vmatpush.msra.mxu0 0.0
    %1078 = vmatpush.msra.mxu0 0.0
    %1079 = vmatpush.msra.mxu0 0.0
    %1080 = vmatpush.msra.mxu0 0.0
    %1081 = vmatpush.msra.mxu0 0.0
    %1082 = vmatpush.msra.mxu0 0.0
    %1083 = vmatpush.msra.mxu0 0.0
    %1084 = vmatpush.msra.mxu0 %v1066
    %1085 = vmatpush.msra.mxu0 %v1065
    %1086 = vmatpush.msra.mxu0 %v1064
    %1087 = vmatpush.msra.mxu0 %v1063
    %1088 = vmatmul.f32.gmra.mxu0 %v1070
    %v1089 = vpop.f32.mrf.mxu0
    %v1090 = vadd.f32 %v1067, %v1089
    %1091 = vdwg.mxu0
    %v1092 = vlaneseq
    %v1093 = vand.u32 %v1092, 127
    %vm1094 = vcmp.lt.s32.totalorder %v1093, 8
    %v1095 = vsel %vm1094, %v1090, -1e+30
    %vm1096 = vcmask 1040384
    %v1097 = vsel %vm1096, %v1095, -inf
    %1098 = vmax.xlane.f32.xlu0 %v1097
    %v1099 = vpop.xlane.xlu0 %1098
    %v1100 = vsub.f32 %v1095, %v1099
    %v1101 = vmul.f32 %v1100, 1.442695
    %v1102 = vpow.pop %v1101
    %v1103 = vsel %vm1096, %v1102, 0.0
    %1104 = vadd.xlane.f32.xlu0 %v1103
    %v1105 = vpop.xlane.xlu0 %1104
    %v1106 = vlog2.pop %v1105
    %v1107 = vmul.f32 %v1106, 0.6931472
    %v1108 = vadd.f32 %v1099, %v1107
    %v1109 = vsub.f32 %v1090, %v1108
    %1110 = vst [vmem:[#allocation8] sm:$0xff] 0.0
    %1111 = vst [vmem:[#allocation8] sm:$0x1] %v1109
    %1112 = vst [vmem:[#allocation8 + $0x1] sm:$0x1] %v1062
    %1113 = vst [vmem:[#allocation8 + $0x2] sm:$0x1] %v1060
    // Predicated region
    $region18: #{tpu_custom_call.1} parent=1 // pred_check
      _
    $region19: #{tpu_custom_call.1} parent=1 // pred_check_branch
      %1115 = sbr.rel (0) target = $region21
    $region20: #{tpu_custom_call.1} parent=1 // pred_region
      %1117 = vsyncadd [#allocation5], 0
      %s1119 = sshll.u32 [#allocation8], 4
      %s1120 = int_to_ptr.vmem [resolvable:$true] %s1119
      %s1121 = sshll.u32 %s2, 4
      %s1122 = int_to_ptr.hbm [resolvable:$true] %s1121
      %1124 = dma.vmem_to_hbm [thread:$0]  %s1120, 128, %s1122, [#allocation5]
    $region21: #{tpu_custom_call.1} parent=1 // pred_fallthru
      _
    // Predicated region
    $region22: #{tpu_custom_call.1} parent=1 // pred_check
      _
    $region23: #{tpu_custom_call.1} parent=1 // pred_check_branch
      %1126 = sbr.rel (0) target = $region25
    $region24: #{tpu_custom_call.1} parent=1 // pred_region
      %1128 = dma.done [#allocation5], 128
    $region25: #{tpu_custom_call.1} parent=1 // pred_fallthru
      _
    %1129 = vsyncpa [#allocation4], 1
    %1130 = vsyncpa [#allocation7], 1
    %1131 = vsyncpa [#allocation5], 1

</llo_original>
